<compile_context>
chip_gen: v5e
topology: v5e:2x2
jax: 0.10.0
libtpu: 0.0.40
codegen_flags: <defaults>
</compile_context>

<pallas_src>
import functools

import jax
import jax.numpy as jnp
import numpy as np
from jax.experimental import pallas as pl
from jax.experimental.pallas import tpu as pltpu


def _round_up(x, m):
    return (x + m - 1) // m * m


def _vmem_budget_bytes():
    """~60% of physical VMEM; conservative fallback if the query fails."""
    try:
        cap = pltpu.get_tpu_info().vmem_capacity_bytes
    except Exception:
        cap = 128 << 20
    return int(cap * 0.6)


def _estimate_vmem_bytes(bt, n_pad, d, inner, heads, x_itemsize, out_itemsize,
                         compute_itemsize=2):
    """Rough per-grid-step VMEM footprint (blocks, weights, intermediates)."""
    rows = bt * n_pad
    dim_head = inner // heads
    total = 0
    # double-buffered activation / output blocks (BlockSpec pipelining)
    total += 2 * bt * n_pad * d * x_itemsize
    total += 2 * bt * n_pad * d * out_itemsize
    # single-buffered weights / LN params / bias
    total += d * 3 * inner * compute_itemsize          # fused QKV weight (bf16)
    total += inner * d * compute_itemsize               # output weight (bf16)
    total += 3 * d * 4                                   # gamma, beta, bias (f32)
    # in-kernel intermediates
    total += rows * d * 4                                # centered x / xn (f32)
    total += rows * d * compute_itemsize                 # xn (bf16)
    total += rows * 3 * inner * (4 + compute_itemsize)   # qkv acc + bf16 cast
    total += rows * d * 4                                # output accumulator f32
    # one head's live set (scores f32 + probs + per-head q/k/v slices)
    total += bt * n_pad * n_pad * (4 + compute_itemsize)
    total += 3 * rows * dim_head * compute_itemsize
    return total


def _pick_batch_tile(b, n_pad, d, inner, heads, x_itemsize, out_itemsize,
                     vmem_budget, target_rows=512, min_grid=4):
    """Largest divisor of b that keeps >= min(b, min_grid) grid steps, a
    reasonable MXU row count, and fits the VMEM budget."""
    min_steps = min(b, min_grid)
    best = 1
    for bt in range(1, b + 1):
        if b % bt:
            continue
        if (b // bt) < min_steps:
            break                      # larger bt only shrinks the grid more
        if bt * n_pad > target_rows:
            continue
        if _estimate_vmem_bytes(bt, n_pad, d, inner, heads,
                                x_itemsize, out_itemsize) > vmem_budget:
            continue
        best = bt
    return best


def _attention_kernel(x_ref, gamma_ref, beta_ref, wqkv_ref, wo_ref, bo_ref,
                      o_ref, *, heads, dim_head, n_real, eps, compute_dtype):
    """One batch-tile per grid step; everything resident in VMEM."""
    bt, n_pad, d = x_ref.shape
    inner = heads * dim_head
    rows = bt * n_pad

    # Flatten (Bt, N, D) -> (Bt*N, D): tall M for the projection matmuls.
    x = x_ref[...].reshape(rows, d).astype(jnp.float32)

    # ---- LayerNorm (no padded feature columns: D is unpadded) --------------
    inv_d = jnp.float32(1.0 / d)
    mean = jnp.sum(x, axis=-1, keepdims=True) * inv_d
    xc = x - mean
    var = jnp.sum(xc * xc, axis=-1, keepdims=True) * inv_d
    xn = xc * jax.lax.rsqrt(var + eps)
    xn = (xn * gamma_ref[...] + beta_ref[...]).astype(compute_dtype)

    # ---- Fused QKV projection (softmax scale pre-folded into Q columns) ----
    qkv = jnp.dot(xn, wqkv_ref[...],
                  preferred_element_type=jnp.float32).astype(compute_dtype)

    # ---- Per-head attention; fold heads straight into the output proj ------
    y_acc = jnp.zeros((rows, d), jnp.float32)
    for h in range(heads):                               # static unroll
        lo = h * dim_head
        qh = qkv[:, lo:lo + dim_head].reshape(bt, n_pad, dim_head)
        kh = qkv[:, inner + lo:inner + lo + dim_head].reshape(bt, n_pad, dim_head)
        vh = qkv[:, 2 * inner + lo:2 * inner + lo + dim_head].reshape(
            bt, n_pad, dim_head)

        dots = jnp.einsum('bnd,bmd->bnm', qh, kh,
                          preferred_element_type=jnp.float32)  # (bt, N, N) f32
        if n_pad != n_real:
            key_id = jax.lax.broadcasted_iota(jnp.int32, dots.shape, 2)
            dots = jnp.where(key_id < n_real, dots, jnp.float32(-1e30))

        # Row-max & mask in f32; exp on bf16 (EUP bf16 on v6e/v7x); sum in f32.
        dots = dots - jnp.max(dots, axis=-1, keepdims=True)
        p = jnp.exp(dots.astype(compute_dtype))
        denom = jnp.sum(p.astype(jnp.float32), axis=-1, keepdims=True)
        inv = pl.reciprocal(denom, approx=True)            # EUP vrcp
        attn = (p.astype(jnp.float32) * inv).astype(compute_dtype)

        oh = jnp.einsum('bnm,bmd->bnd', attn, vh,
                        preferred_element_type=jnp.float32)  # (bt, N, dh)
        oh = oh.reshape(rows, dim_head).astype(compute_dtype)
        # Accumulate this head's contribution to the output projection.
        y_acc = y_acc + jnp.dot(oh, wo_ref[lo:lo + dim_head, :],
                                preferred_element_type=jnp.float32)

    y = y_acc + bo_ref[...]
    o_ref[...] = y.reshape(bt, n_pad, d).astype(o_ref.dtype)


def attention_pallas(x, gamma, beta, w_qkv, w_out, b_out, *, heads, dim_head,
                     compute_dtype=jnp.bfloat16):
    """x: (B, N, D); w_qkv: (D, 3*inner); w_out: (inner, D).

    gamma/beta/b_out may be (D,) or (1, D). Returns (B, N, D) in x.dtype.
    (If the module's project_out were False, pass identity w_out / zero b_out.)
    """
    b, n, d = x.shape
    inner = heads * dim_head
    assert w_qkv.shape == (d, 3 * inner)
    assert w_out.shape == (inner, d)
    scale = float(dim_head) ** (-0.5)

    n_pad = _round_up(n, 8)        # sublane tile; D deliberately NOT padded
    pad_n = n_pad - n

    budget = _vmem_budget_bytes()
    itemsize = jnp.dtype(x.dtype).itemsize
    bt = _pick_batch_tile(b, n_pad, d, inner, heads, itemsize, itemsize, budget)
    vmem_need = _estimate_vmem_bytes(bt, n_pad, d, inner, heads,
                                     itemsize, itemsize)
    vmem_limit = int(min(budget, max(2 * vmem_need, 16 << 20)))

    # Host-side prep: fold scale into Q columns, fuse QKV, cast weights bf16.
    w_fused = jnp.concatenate([w_qkv[:, :inner] * scale, w_qkv[:, inner:]],
                              axis=1).astype(compute_dtype)      # (D, 3*inner)
    w_o = w_out.astype(compute_dtype)                            # (inner, D)

    x_p = jnp.pad(x, ((0, 0), (0, pad_n), (0, 0))) if pad_n else x
    gamma_r = jnp.reshape(gamma, (1, d)).astype(jnp.float32)
    beta_r = jnp.reshape(beta, (1, d)).astype(jnp.float32)
    b_o_r = jnp.reshape(b_out, (1, d)).astype(jnp.float32)

    kernel = functools.partial(
        _attention_kernel, heads=heads, dim_head=dim_head,
        n_real=n, eps=1e-5, compute_dtype=compute_dtype)

    def _call(single_buffer_weights):
        def inv_spec(shape):
            # Grid-invariant operands: index_map is constant, so a single
            # buffer is enough (halves their VMEM footprint).
            if single_buffer_weights:
                return pl.BlockSpec(shape, lambda i: (0,) * len(shape),
                                    pipeline_mode=pl.Buffered(1))
            return pl.BlockSpec(shape, lambda i: (0,) * len(shape))

        grid_spec = pltpu.PrefetchScalarGridSpec(
            num_scalar_prefetch=0,
            grid=(b // bt,),
            in_specs=[
                pl.BlockSpec((bt, n_pad, d), lambda i: (i, 0, 0)),   # x
                inv_spec((1, d)),                                    # gamma
                inv_spec((1, d)),                                    # beta
                inv_spec((d, 3 * inner)),                            # W_qkv
                inv_spec((inner, d)),                                # W_out
                inv_spec((1, d)),                                    # b_out
            ],
            out_specs=pl.BlockSpec((bt, n_pad, d), lambda i: (i, 0, 0)),
        )
        return pl.pallas_call(
            kernel,
            out_shape=jax.ShapeDtypeStruct((b, n_pad, d), x.dtype),
            grid_spec=grid_spec,
            compiler_params=pltpu.CompilerParams(
                dimension_semantics=("parallel",),
                vmem_limit_bytes=vmem_limit),
        )(x_p, gamma_r, beta_r, w_fused, w_o, b_o_r)

    try:
        y_p = jax.block_until_ready(_call(True))
    except Exception:
        # Fallback if pipeline_mode=pl.Buffered(1) is unsupported on this jax.
        y_p = jax.block_until_ready(_call(False))

    return y_p[:, :n, :] if pad_n else y_p


def attention_reference(x, gamma, beta, w_qkv, w_out, b_out, *, heads, dim_head):
    """Pure-JAX (f32) reference reproducing the PyTorch forward pass."""
    b, n, d = x.shape
    inner = heads * dim_head
    scale = float(dim_head) ** (-0.5)

    mean = jnp.mean(x, axis=-1, keepdims=True)
    var = jnp.mean((x - mean) ** 2, axis=-1, keepdims=True)
    xn = (x - mean) / jnp.sqrt(var + 1e-5) * jnp.reshape(gamma, (d,)) \
        + jnp.reshape(beta, (d,))

    qkv = xn @ w_qkv
    q, k, v = jnp.split(qkv, 3, axis=-1)

    def split_heads(t):
        return t.reshape(b, n, heads, dim_head).transpose(0, 2, 1, 3)

    q, k, v = map(split_heads, (q, k, v))
    dots = jnp.einsum('bhnd,bhmd->bhnm', q, k) * scale
    attn = jax.nn.softmax(dots, axis=-1)
    out = jnp.einsum('bhnm,bhmd->bhnd', attn, v)
    out = out.transpose(0, 2, 1, 3).reshape(b, n, inner)
    return out @ w_out + jnp.reshape(b_out, (d,))


if __name__ == "__main__":
    # Small shapes consistent with the module's forward pass.
    B, N, DIM = 2, 8, 32
    HEADS, DIM_HEAD = 2, 16
    INNER = HEADS * DIM_HEAD

    key = jax.random.PRNGKey(0)
    kx, kqkv, kwo, kbo, kg, kb = jax.random.split(key, 6)

    x = jax.random.normal(kx, (B, N, DIM), dtype=jnp.float32)
    # torch Linear stores (out, in); we use the pre-transposed (in, out)
    # layout so the kernel computes x @ W.
    w_qkv = jax.random.normal(kqkv, (DIM, 3 * INNER), dtype=jnp.float32) * 0.05
    w_out = jax.random.normal(kwo, (INNER, DIM), dtype=jnp.float32) * 0.05
    b_out = jax.random.normal(kbo, (DIM,), dtype=jnp.float32) * 0.05
    gamma = jnp.ones((DIM,), dtype=jnp.float32) + \
        0.1 * jax.random.normal(kg, (DIM,), dtype=jnp.float32)
    beta = 0.1 * jax.random.normal(kb, (DIM,), dtype=jnp.float32)

    y = attention_pallas(x, gamma, beta, w_qkv, w_out, b_out,
                         heads=HEADS, dim_head=DIM_HEAD)
    y = jax.block_until_ready(y)

    y_ref = attention_reference(x, gamma, beta, w_qkv, w_out, b_out,
                                heads=HEADS, dim_head=DIM_HEAD)
    # bf16 MXU operands / bf16 exp + approx reciprocal loosen tolerance a bit.
    np.testing.assert_allclose(np.asarray(y), np.asarray(y_ref),
                               atol=1e-2, rtol=1e-2)
    print("KERNEL_OK")
</pallas_src>

<mosaic_0001>
module attributes {stable_mosaic.version = 11 : i64} {
  func.func @_attention_kernel(%arg0: i32, %arg1: memref<1x8x32xf32, #tpu.memory_space<vmem>>, %arg2: memref<1x32xf32, #tpu.memory_space<vmem>>, %arg3: memref<1x32xf32, #tpu.memory_space<vmem>>, %arg4: memref<32x96xbf16, #tpu.memory_space<vmem>>, %arg5: memref<32x32xbf16, #tpu.memory_space<vmem>>, %arg6: memref<1x32xf32, #tpu.memory_space<vmem>>, %arg7: memref<1x8x32xf32, #tpu.memory_space<vmem>>) attributes {dimension_semantics = [#tpu.dimension_semantics<parallel>], iteration_bounds = array<i64: 2>, scalar_prefetch = 0 : i64, scratch_operands = 0 : i64, tpu.core_type = #tpu.core_type<tc>, window_params = [{transform_indices = @transform_0, window_bounds = array<i64: 1, 8, 32>}, {pipeline_mode = #tpu.pipeline_mode<synchronous>, transform_indices = @transform_1, window_bounds = array<i64: 1, 32>}, {pipeline_mode = #tpu.pipeline_mode<synchronous>, transform_indices = @transform_2, window_bounds = array<i64: 1, 32>}, {pipeline_mode = #tpu.pipeline_mode<synchronous>, transform_indices = @transform_3, window_bounds = array<i64: 32, 96>}, {pipeline_mode = #tpu.pipeline_mode<synchronous>, transform_indices = @transform_4, window_bounds = array<i64: 32, 32>}, {pipeline_mode = #tpu.pipeline_mode<synchronous>, transform_indices = @transform_5, window_bounds = array<i64: 1, 32>}, {transform_indices = @transform_6, window_bounds = array<i64: 1, 8, 32>}]} {
    %c0 = arith.constant 0 : index
    %c0_0 = arith.constant 0 : index
    %c0_1 = arith.constant 0 : index
    %0 = vector.load %arg1[%c0, %c0_0, %c0_1] : memref<1x8x32xf32, #tpu.memory_space<vmem>>, vector<1x8x32xf32>
    %1 = vector.shape_cast %0 : vector<1x8x32xf32> to vector<8x32xf32>
    %cst = arith.constant dense<0.000000e+00> : vector<8xf32>
    %2 = vector.multi_reduction <add>, %1, %cst [1] : vector<8x32xf32> to vector<8xf32>
    %3 = vector.shape_cast %2 : vector<8xf32> to vector<8x1xf32>
    %cst_2 = arith.constant 3.125000e-02 : f32
    %4 = vector.broadcast %cst_2 : f32 to vector<8x1xf32>
    %5 = arith.mulf %3, %4 : vector<8x1xf32>
    %6 = vector.broadcast %5 : vector<8x1xf32> to vector<8x32xf32>
    %7 = arith.subf %1, %6 : vector<8x32xf32>
    %8 = arith.mulf %7, %7 : vector<8x32xf32>
    %cst_3 = arith.constant dense<0.000000e+00> : vector<8xf32>
    %9 = vector.multi_reduction <add>, %8, %cst_3 [1] : vector<8x32xf32> to vector<8xf32>
    %10 = vector.shape_cast %9 : vector<8xf32> to vector<8x1xf32>
    %cst_4 = arith.constant 3.125000e-02 : f32
    %11 = vector.broadcast %cst_4 : f32 to vector<8x1xf32>
    %12 = arith.mulf %10, %11 : vector<8x1xf32>
    %cst_5 = arith.constant 9.99999974E-6 : f32
    %13 = vector.broadcast %cst_5 : f32 to vector<8x1xf32>
    %14 = arith.addf %12, %13 : vector<8x1xf32>
    %15 = math.rsqrt %14 : vector<8x1xf32>
    %16 = vector.broadcast %15 : vector<8x1xf32> to vector<8x32xf32>
    %17 = arith.mulf %7, %16 : vector<8x32xf32>
    %c0_6 = arith.constant 0 : index
    %c0_7 = arith.constant 0 : index
    %18 = vector.load %arg2[%c0_6, %c0_7] : memref<1x32xf32, #tpu.memory_space<vmem>>, vector<1x32xf32>
    %19 = vector.broadcast %18 : vector<1x32xf32> to vector<8x32xf32>
    %20 = arith.mulf %17, %19 : vector<8x32xf32>
    %c0_8 = arith.constant 0 : index
    %c0_9 = arith.constant 0 : index
    %21 = vector.load %arg3[%c0_8, %c0_9] : memref<1x32xf32, #tpu.memory_space<vmem>>, vector<1x32xf32>
    %22 = vector.broadcast %21 : vector<1x32xf32> to vector<8x32xf32>
    %23 = arith.addf %20, %22 : vector<8x32xf32>
    %24 = arith.truncf %23 : vector<8x32xf32> to vector<8x32xbf16>
    %c0_10 = arith.constant 0 : index
    %c0_11 = arith.constant 0 : index
    %25 = vector.load %arg4[%c0_10, %c0_11] : memref<32x96xbf16, #tpu.memory_space<vmem>>, vector<32x96xbf16>
    %cst_12 = arith.constant dense<0.000000e+00> : vector<8x96xf32>
    %26 = tpu.matmul %24, %25, %cst_12 {dimension_numbers = #tpu.dot_dimension_numbers<[1], [0], [0], [1], [0, 0, 1, 1], [], []>} : vector<8x32xbf16>, vector<32x96xbf16>, vector<8x96xf32> -> vector<8x96xf32>
    %27 = arith.truncf %26 : vector<8x96xf32> to vector<8x96xbf16>
    %cst_13 = arith.constant 0.000000e+00 : f32
    %28 = vector.broadcast %cst_13 : f32 to vector<8x32xf32>
    %29 = vector.extract_strided_slice %27 {offsets = [0, 0], sizes = [8, 16], strides = [1, 1]} : vector<8x96xbf16> to vector<8x16xbf16>
    %30 = vector.shape_cast %29 : vector<8x16xbf16> to vector<1x8x16xbf16>
    %31 = vector.extract_strided_slice %27 {offsets = [0, 32], sizes = [8, 16], strides = [1, 1]} : vector<8x96xbf16> to vector<8x16xbf16>
    %32 = vector.shape_cast %31 : vector<8x16xbf16> to vector<1x8x16xbf16>
    %33 = vector.extract_strided_slice %27 {offsets = [0, 64], sizes = [8, 16], strides = [1, 1]} : vector<8x96xbf16> to vector<8x16xbf16>
    %34 = vector.shape_cast %33 : vector<8x16xbf16> to vector<1x8x16xbf16>
    "tpu.trace_start"() <{level = 10 : i32, message = "bnd,bmd->bnm"}> : () -> ()
    %cst_14 = arith.constant dense<0.000000e+00> : vector<1x8x8xf32>
    %35 = tpu.matmul %30, %32, %cst_14 {dimension_numbers = #tpu.dot_dimension_numbers<[2], [2], [1], [1], [0, 0, 0, 1, 1, 1], [0], [0]>} : vector<1x8x16xbf16>, vector<1x8x16xbf16>, vector<1x8x8xf32> -> vector<1x8x8xf32>
    "tpu.trace_stop"() : () -> ()
    %cst_15 = arith.constant dense<0xFF800000> : vector<1x8xf32>
    %36 = vector.multi_reduction <maximumf>, %35, %cst_15 [2] : vector<1x8x8xf32> to vector<1x8xf32>
    %37 = vector.shape_cast %36 : vector<1x8xf32> to vector<1x8x1xf32>
    %38 = vector.broadcast %37 : vector<1x8x1xf32> to vector<1x8x8xf32>
    %39 = arith.subf %35, %38 : vector<1x8x8xf32>
    %40 = arith.truncf %39 : vector<1x8x8xf32> to vector<1x8x8xbf16>
    %41 = math.exp %40 : vector<1x8x8xbf16>
    %42 = arith.extf %41 : vector<1x8x8xbf16> to vector<1x8x8xf32>
    %cst_16 = arith.constant dense<0.000000e+00> : vector<1x8xf32>
    %43 = vector.multi_reduction <add>, %42, %cst_16 [2] : vector<1x8x8xf32> to vector<1x8xf32>
    %44 = vector.shape_cast %43 : vector<1x8xf32> to vector<1x8x1xf32>
    %45 = tpu.reciprocal %44 {approx = true} : vector<1x8x1xf32> -> vector<1x8x1xf32>
    %46 = arith.extf %41 : vector<1x8x8xbf16> to vector<1x8x8xf32>
    %47 = vector.broadcast %45 : vector<1x8x1xf32> to vector<1x8x8xf32>
    %48 = arith.mulf %46, %47 : vector<1x8x8xf32>
    %49 = arith.truncf %48 : vector<1x8x8xf32> to vector<1x8x8xbf16>
    "tpu.trace_start"() <{level = 10 : i32, message = "bnm,bmd->bnd"}> : () -> ()
    %cst_17 = arith.constant dense<0.000000e+00> : vector<1x8x16xf32>
    %50 = tpu.matmul %49, %34, %cst_17 {dimension_numbers = #tpu.dot_dimension_numbers<[2], [1], [1], [2], [0, 0, 0, 1, 1, 2], [0], [0]>} : vector<1x8x8xbf16>, vector<1x8x16xbf16>, vector<1x8x16xf32> -> vector<1x8x16xf32>
    "tpu.trace_stop"() : () -> ()
    %51 = vector.shape_cast %50 : vector<1x8x16xf32> to vector<8x16xf32>
    %52 = arith.truncf %51 : vector<8x16xf32> to vector<8x16xbf16>
    %c0_18 = arith.constant 0 : index
    %c0_19 = arith.constant 0 : index
    %53 = vector.load %arg5[%c0_18, %c0_19] : memref<32x32xbf16, #tpu.memory_space<vmem>>, vector<16x32xbf16>
    %cst_20 = arith.constant dense<0.000000e+00> : vector<8x32xf32>
    %54 = tpu.matmul %52, %53, %cst_20 {dimension_numbers = #tpu.dot_dimension_numbers<[1], [0], [0], [1], [0, 0, 1, 1], [], []>} : vector<8x16xbf16>, vector<16x32xbf16>, vector<8x32xf32> -> vector<8x32xf32>
    %55 = arith.addf %28, %54 : vector<8x32xf32>
    %56 = vector.extract_strided_slice %27 {offsets = [0, 16], sizes = [8, 16], strides = [1, 1]} : vector<8x96xbf16> to vector<8x16xbf16>
    %57 = vector.shape_cast %56 : vector<8x16xbf16> to vector<1x8x16xbf16>
    %58 = vector.extract_strided_slice %27 {offsets = [0, 48], sizes = [8, 16], strides = [1, 1]} : vector<8x96xbf16> to vector<8x16xbf16>
    %59 = vector.shape_cast %58 : vector<8x16xbf16> to vector<1x8x16xbf16>
    %60 = vector.extract_strided_slice %27 {offsets = [0, 80], sizes = [8, 16], strides = [1, 1]} : vector<8x96xbf16> to vector<8x16xbf16>
    %61 = vector.shape_cast %60 : vector<8x16xbf16> to vector<1x8x16xbf16>
    "tpu.trace_start"() <{level = 10 : i32, message = "bnd,bmd->bnm"}> : () -> ()
    %cst_21 = arith.constant dense<0.000000e+00> : vector<1x8x8xf32>
    %62 = tpu.matmul %57, %59, %cst_21 {dimension_numbers = #tpu.dot_dimension_numbers<[2], [2], [1], [1], [0, 0, 0, 1, 1, 1], [0], [0]>} : vector<1x8x16xbf16>, vector<1x8x16xbf16>, vector<1x8x8xf32> -> vector<1x8x8xf32>
    "tpu.trace_stop"() : () -> ()
    %cst_22 = arith.constant dense<0xFF800000> : vector<1x8xf32>
    %63 = vector.multi_reduction <maximumf>, %62, %cst_22 [2] : vector<1x8x8xf32> to vector<1x8xf32>
    %64 = vector.shape_cast %63 : vector<1x8xf32> to vector<1x8x1xf32>
    %65 = vector.broadcast %64 : vector<1x8x1xf32> to vector<1x8x8xf32>
    %66 = arith.subf %62, %65 : vector<1x8x8xf32>
    %67 = arith.truncf %66 : vector<1x8x8xf32> to vector<1x8x8xbf16>
    %68 = math.exp %67 : vector<1x8x8xbf16>
    %69 = arith.extf %68 : vector<1x8x8xbf16> to vector<1x8x8xf32>
    %cst_23 = arith.constant dense<0.000000e+00> : vector<1x8xf32>
    %70 = vector.multi_reduction <add>, %69, %cst_23 [2] : vector<1x8x8xf32> to vector<1x8xf32>
    %71 = vector.shape_cast %70 : vector<1x8xf32> to vector<1x8x1xf32>
    %72 = tpu.reciprocal %71 {approx = true} : vector<1x8x1xf32> -> vector<1x8x1xf32>
    %73 = arith.extf %68 : vector<1x8x8xbf16> to vector<1x8x8xf32>
    %74 = vector.broadcast %72 : vector<1x8x1xf32> to vector<1x8x8xf32>
    %75 = arith.mulf %73, %74 : vector<1x8x8xf32>
    %76 = arith.truncf %75 : vector<1x8x8xf32> to vector<1x8x8xbf16>
    "tpu.trace_start"() <{level = 10 : i32, message = "bnm,bmd->bnd"}> : () -> ()
    %cst_24 = arith.constant dense<0.000000e+00> : vector<1x8x16xf32>
    %77 = tpu.matmul %76, %61, %cst_24 {dimension_numbers = #tpu.dot_dimension_numbers<[2], [1], [1], [2], [0, 0, 0, 1, 1, 2], [0], [0]>} : vector<1x8x8xbf16>, vector<1x8x16xbf16>, vector<1x8x16xf32> -> vector<1x8x16xf32>
    "tpu.trace_stop"() : () -> ()
    %78 = vector.shape_cast %77 : vector<1x8x16xf32> to vector<8x16xf32>
    %79 = arith.truncf %78 : vector<8x16xf32> to vector<8x16xbf16>
    %c16 = arith.constant 16 : index
    %c0_25 = arith.constant 0 : index
    %80 = vector.load %arg5[%c16, %c0_25] : memref<32x32xbf16, #tpu.memory_space<vmem>>, vector<16x32xbf16>
    %cst_26 = arith.constant dense<0.000000e+00> : vector<8x32xf32>
    %81 = tpu.matmul %79, %80, %cst_26 {dimension_numbers = #tpu.dot_dimension_numbers<[1], [0], [0], [1], [0, 0, 1, 1], [], []>} : vector<8x16xbf16>, vector<16x32xbf16>, vector<8x32xf32> -> vector<8x32xf32>
    %82 = arith.addf %55, %81 : vector<8x32xf32>
    %c0_27 = arith.constant 0 : index
    %c0_28 = arith.constant 0 : index
    %83 = vector.load %arg6[%c0_27, %c0_28] : memref<1x32xf32, #tpu.memory_space<vmem>>, vector<1x32xf32>
    %84 = vector.broadcast %83 : vector<1x32xf32> to vector<8x32xf32>
    %85 = arith.addf %82, %84 : vector<8x32xf32>
    %86 = vector.shape_cast %85 : vector<8x32xf32> to vector<1x8x32xf32>
    %c0_29 = arith.constant 0 : index
    %c0_30 = arith.constant 0 : index
    %c0_31 = arith.constant 0 : index
    %87 = vector.load %arg7[%c0_29, %c0_30, %c0_31] : memref<1x8x32xf32, #tpu.memory_space<vmem>>, vector<1x8x32xf32>
    tpu.vector_store %arg7[%c0_29, %c0_30, %c0_31], %86 {strides = array<i32>} : memref<1x8x32xf32, #tpu.memory_space<vmem>>, vector<1x8x32xf32>,
    return
  }
  func.func @transform_0(%arg0: i32) -> (i32, i32, i32) {
    %c0_i32 = arith.constant 0 : i32
    %c0_i32_0 = arith.constant 0 : i32
    %c0_i32_1 = arith.constant 0 : i32
    return %arg0, %c0_i32, %c0_i32_0 : i32, i32, i32
  }
  func.func @transform_1(%arg0: i32) -> (i32, i32) {
    %c0_i32 = arith.constant 0 : i32
    %c0_i32_0 = arith.constant 0 : i32
    %c0_i32_1 = arith.constant 0 : i32
    return %c0_i32, %c0_i32_0 : i32, i32
  }
  func.func @transform_2(%arg0: i32) -> (i32, i32) {
    %c0_i32 = arith.constant 0 : i32
    %c0_i32_0 = arith.constant 0 : i32
    %c0_i32_1 = arith.constant 0 : i32
    return %c0_i32, %c0_i32_0 : i32, i32
  }
  func.func @transform_3(%arg0: i32) -> (i32, i32) {
    %c0_i32 = arith.constant 0 : i32
    %c0_i32_0 = arith.constant 0 : i32
    %c0_i32_1 = arith.constant 0 : i32
    return %c0_i32, %c0_i32_0 : i32, i32
  }
  func.func @transform_4(%arg0: i32) -> (i32, i32) {
    %c0_i32 = arith.constant 0 : i32
    %c0_i32_0 = arith.constant 0 : i32
    %c0_i32_1 = arith.constant 0 : i32
    return %c0_i32, %c0_i32_0 : i32, i32
  }
  func.func @transform_5(%arg0: i32) -> (i32, i32) {
    %c0_i32 = arith.constant 0 : i32
    %c0_i32_0 = arith.constant 0 : i32
    %c0_i32_1 = arith.constant 0 : i32
    return %c0_i32, %c0_i32_0 : i32, i32
  }
  func.func @transform_6(%arg0: i32) -> (i32, i32, i32) {
    %c0_i32 = arith.constant 0 : i32
    %c0_i32_0 = arith.constant 0 : i32
    %c0_i32_1 = arith.constant 0 : i32
    return %arg0, %c0_i32, %c0_i32_0 : i32, i32, i32
  }
}

module attributes {stable_mosaic.version = 11 : i64} {
  func.func @_attention_kernel(%arg0: i32, %arg1: memref<1x8x32xf32, #tpu.memory_space<vmem>>, %arg2: memref<1x32xf32, #tpu.memory_space<vmem>>, %arg3: memref<1x32xf32, #tpu.memory_space<vmem>>, %arg4: memref<32x96xbf16, #tpu.memory_space<vmem>>, %arg5: memref<32x32xbf16, #tpu.memory_space<vmem>>, %arg6: memref<1x32xf32, #tpu.memory_space<vmem>>, %arg7: memref<1x8x32xf32, #tpu.memory_space<vmem>>) attributes {dimension_semantics = [#tpu.dimension_semantics<parallel>], iteration_bounds = array<i64: 2>, scalar_prefetch = 0 : i64, scratch_operands = 0 : i64, tpu.core_type = #tpu.core_type<tc>, window_params = [{transform_indices = @transform_0, window_bounds = array<i64: 1, 8, 32>}, {pipeline_mode = #tpu.pipeline_mode<synchronous>, transform_indices = @transform_1, window_bounds = array<i64: 1, 32>}, {pipeline_mode = #tpu.pipeline_mode<synchronous>, transform_indices = @transform_2, window_bounds = array<i64: 1, 32>}, {pipeline_mode = #tpu.pipeline_mode<synchronous>, transform_indices = @transform_3, window_bounds = array<i64: 32, 96>}, {pipeline_mode = #tpu.pipeline_mode<synchronous>, transform_indices = @transform_4, window_bounds = array<i64: 32, 32>}, {pipeline_mode = #tpu.pipeline_mode<synchronous>, transform_indices = @transform_5, window_bounds = array<i64: 1, 32>}, {transform_indices = @transform_6, window_bounds = array<i64: 1, 8, 32>}]} {
    %c0 = arith.constant 0 : index
    %c0_0 = arith.constant 0 : index
    %c0_1 = arith.constant 0 : index
    %0 = vector.load %arg1[%c0, %c0_0, %c0_1] : memref<1x8x32xf32, #tpu.memory_space<vmem>>, vector<1x8x32xf32>
    %1 = vector.shape_cast %0 : vector<1x8x32xf32> to vector<8x32xf32>
    %cst = arith.constant dense<0.000000e+00> : vector<8xf32>
    %2 = vector.multi_reduction <add>, %1, %cst [1] : vector<8x32xf32> to vector<8xf32>
    %3 = vector.shape_cast %2 : vector<8xf32> to vector<8x1xf32>
    %cst_2 = arith.constant 3.125000e-02 : f32
    %4 = vector.broadcast %cst_2 : f32 to vector<8x1xf32>
    %5 = arith.mulf %3, %4 : vector<8x1xf32>
    %6 = vector.broadcast %5 : vector<8x1xf32> to vector<8x32xf32>
    %7 = arith.subf %1, %6 : vector<8x32xf32>
    %8 = arith.mulf %7, %7 : vector<8x32xf32>
    %cst_3 = arith.constant dense<0.000000e+00> : vector<8xf32>
    %9 = vector.multi_reduction <add>, %8, %cst_3 [1] : vector<8x32xf32> to vector<8xf32>
    %10 = vector.shape_cast %9 : vector<8xf32> to vector<8x1xf32>
    %cst_4 = arith.constant 3.125000e-02 : f32
    %11 = vector.broadcast %cst_4 : f32 to vector<8x1xf32>
    %12 = arith.mulf %10, %11 : vector<8x1xf32>
    %cst_5 = arith.constant 9.99999974E-6 : f32
    %13 = vector.broadcast %cst_5 : f32 to vector<8x1xf32>
    %14 = arith.addf %12, %13 : vector<8x1xf32>
    %15 = math.rsqrt %14 : vector<8x1xf32>
    %16 = vector.broadcast %15 : vector<8x1xf32> to vector<8x32xf32>
    %17 = arith.mulf %7, %16 : vector<8x32xf32>
    %c0_6 = arith.constant 0 : index
    %c0_7 = arith.constant 0 : index
    %18 = vector.load %arg2[%c0_6, %c0_7] : memref<1x32xf32, #tpu.memory_space<vmem>>, vector<1x32xf32>
    %19 = vector.broadcast %18 : vector<1x32xf32> to vector<8x32xf32>
    %20 = arith.mulf %17, %19 : vector<8x32xf32>
    %c0_8 = arith.constant 0 : index
    %c0_9 = arith.constant 0 : index
    %21 = vector.load %arg3[%c0_8, %c0_9] : memref<1x32xf32, #tpu.memory_space<vmem>>, vector<1x32xf32>
    %22 = vector.broadcast %21 : vector<1x32xf32> to vector<8x32xf32>
    %23 = arith.addf %20, %22 : vector<8x32xf32>
    %24 = arith.truncf %23 : vector<8x32xf32> to vector<8x32xbf16>
    %c0_10 = arith.constant 0 : index
    %c0_11 = arith.constant 0 : index
    %25 = vector.load %arg4[%c0_10, %c0_11] : memref<32x96xbf16, #tpu.memory_space<vmem>>, vector<32x96xbf16>
    %cst_12 = arith.constant dense<0.000000e+00> : vector<8x96xf32>
    %26 = tpu.matmul %24, %25, %cst_12 {dimension_numbers = #tpu.dot_dimension_numbers<[1], [0], [0], [1], [0, 0, 1, 1], [], []>} : vector<8x32xbf16>, vector<32x96xbf16>, vector<8x96xf32> -> vector<8x96xf32>
    %27 = arith.truncf %26 : vector<8x96xf32> to vector<8x96xbf16>
    %cst_13 = arith.constant 0.000000e+00 : f32
    %28 = vector.broadcast %cst_13 : f32 to vector<8x32xf32>
    %29 = vector.extract_strided_slice %27 {offsets = [0, 0], sizes = [8, 16], strides = [1, 1]} : vector<8x96xbf16> to vector<8x16xbf16>
    %30 = vector.shape_cast %29 : vector<8x16xbf16> to vector<1x8x16xbf16>
    %31 = vector.extract_strided_slice %27 {offsets = [0, 32], sizes = [8, 16], strides = [1, 1]} : vector<8x96xbf16> to vector<8x16xbf16>
    %32 = vector.shape_cast %31 : vector<8x16xbf16> to vector<1x8x16xbf16>
    %33 = vector.extract_strided_slice %27 {offsets = [0, 64], sizes = [8, 16], strides = [1, 1]} : vector<8x96xbf16> to vector<8x16xbf16>
    %34 = vector.shape_cast %33 : vector<8x16xbf16> to vector<1x8x16xbf16>
    "tpu.trace_start"() <{level = 10 : i32, message = "bnd,bmd->bnm"}> : () -> ()
    %cst_14 = arith.constant dense<0.000000e+00> : vector<1x8x8xf32>
    %35 = tpu.matmul %30, %32, %cst_14 {dimension_numbers = #tpu.dot_dimension_numbers<[2], [2], [1], [1], [0, 0, 0, 1, 1, 1], [0], [0]>} : vector<1x8x16xbf16>, vector<1x8x16xbf16>, vector<1x8x8xf32> -> vector<1x8x8xf32>
    "tpu.trace_stop"() : () -> ()
    %cst_15 = arith.constant dense<0xFF800000> : vector<1x8xf32>
    %36 = vector.multi_reduction <maximumf>, %35, %cst_15 [2] : vector<1x8x8xf32> to vector<1x8xf32>
    %37 = vector.shape_cast %36 : vector<1x8xf32> to vector<1x8x1xf32>
    %38 = vector.broadcast %37 : vector<1x8x1xf32> to vector<1x8x8xf32>
    %39 = arith.subf %35, %38 : vector<1x8x8xf32>
    %40 = arith.truncf %39 : vector<1x8x8xf32> to vector<1x8x8xbf16>
    %41 = math.exp %40 : vector<1x8x8xbf16>
    %42 = arith.extf %41 : vector<1x8x8xbf16> to vector<1x8x8xf32>
    %cst_16 = arith.constant dense<0.000000e+00> : vector<1x8xf32>
    %43 = vector.multi_reduction <add>, %42, %cst_16 [2] : vector<1x8x8xf32> to vector<1x8xf32>
    %44 = vector.shape_cast %43 : vector<1x8xf32> to vector<1x8x1xf32>
    %45 = tpu.reciprocal %44 {approx = true} : vector<1x8x1xf32> -> vector<1x8x1xf32>
    %46 = arith.extf %41 : vector<1x8x8xbf16> to vector<1x8x8xf32>
    %47 = vector.broadcast %45 : vector<1x8x1xf32> to vector<1x8x8xf32>
    %48 = arith.mulf %46, %47 : vector<1x8x8xf32>
    %49 = arith.truncf %48 : vector<1x8x8xf32> to vector<1x8x8xbf16>
    "tpu.trace_start"() <{level = 10 : i32, message = "bnm,bmd->bnd"}> : () -> ()
    %cst_17 = arith.constant dense<0.000000e+00> : vector<1x8x16xf32>
    %50 = tpu.matmul %49, %34, %cst_17 {dimension_numbers = #tpu.dot_dimension_numbers<[2], [1], [1], [2], [0, 0, 0, 1, 1, 2], [0], [0]>} : vector<1x8x8xbf16>, vector<1x8x16xbf16>, vector<1x8x16xf32> -> vector<1x8x16xf32>
    "tpu.trace_stop"() : () -> ()
    %51 = vector.shape_cast %50 : vector<1x8x16xf32> to vector<8x16xf32>
    %52 = arith.truncf %51 : vector<8x16xf32> to vector<8x16xbf16>
    %c0_18 = arith.constant 0 : index
    %c0_19 = arith.constant 0 : index
    %53 = vector.load %arg5[%c0_18, %c0_19] : memref<32x32xbf16, #tpu.memory_space<vmem>>, vector<16x32xbf16>
    %cst_20 = arith.constant dense<0.000000e+00> : vector<8x32xf32>
    %54 = tpu.matmul %52, %53, %cst_20 {dimension_numbers = #tpu.dot_dimension_numbers<[1], [0], [0], [1], [0, 0, 1, 1], [], []>} : vector<8x16xbf16>, vector<16x32xbf16>, vector<8x32xf32> -> vector<8x32xf32>
    %55 = arith.addf %28, %54 : vector<8x32xf32>
    %56 = vector.extract_strided_slice %27 {offsets = [0, 16], sizes = [8, 16], strides = [1, 1]} : vector<8x96xbf16> to vector<8x16xbf16>
    %57 = vector.shape_cast %56 : vector<8x16xbf16> to vector<1x8x16xbf16>
    %58 = vector.extract_strided_slice %27 {offsets = [0, 48], sizes = [8, 16], strides = [1, 1]} : vector<8x96xbf16> to vector<8x16xbf16>
    %59 = vector.shape_cast %58 : vector<8x16xbf16> to vector<1x8x16xbf16>
    %60 = vector.extract_strided_slice %27 {offsets = [0, 80], sizes = [8, 16], strides = [1, 1]} : vector<8x96xbf16> to vector<8x16xbf16>
    %61 = vector.shape_cast %60 : vector<8x16xbf16> to vector<1x8x16xbf16>
    "tpu.trace_start"() <{level = 10 : i32, message = "bnd,bmd->bnm"}> : () -> ()
    %cst_21 = arith.constant dense<0.000000e+00> : vector<1x8x8xf32>
    %62 = tpu.matmul %57, %59, %cst_21 {dimension_numbers = #tpu.dot_dimension_numbers<[2], [2], [1], [1], [0, 0, 0, 1, 1, 1], [0], [0]>} : vector<1x8x16xbf16>, vector<1x8x16xbf16>, vector<1x8x8xf32> -> vector<1x8x8xf32>
    "tpu.trace_stop"() : () -> ()
    %cst_22 = arith.constant dense<0xFF800000> : vector<1x8xf32>
    %63 = vector.multi_reduction <maximumf>, %62, %cst_22 [2] : vector<1x8x8xf32> to vector<1x8xf32>
    %64 = vector.shape_cast %63 : vector<1x8xf32> to vector<1x8x1xf32>
    %65 = vector.broadcast %64 : vector<1x8x1xf32> to vector<1x8x8xf32>
    %66 = arith.subf %62, %65 : vector<1x8x8xf32>
    %67 = arith.truncf %66 : vector<1x8x8xf32> to vector<1x8x8xbf16>
    %68 = math.exp %67 : vector<1x8x8xbf16>
    %69 = arith.extf %68 : vector<1x8x8xbf16> to vector<1x8x8xf32>
    %cst_23 = arith.constant dense<0.000000e+00> : vector<1x8xf32>
    %70 = vector.multi_reduction <add>, %69, %cst_23 [2] : vector<1x8x8xf32> to vector<1x8xf32>
    %71 = vector.shape_cast %70 : vector<1x8xf32> to vector<1x8x1xf32>
    %72 = tpu.reciprocal %71 {approx = true} : vector<1x8x1xf32> -> vector<1x8x1xf32>
    %73 = arith.extf %68 : vector<1x8x8xbf16> to vector<1x8x8xf32>
    %74 = vector.broadcast %72 : vector<1x8x1xf32> to vector<1x8x8xf32>
    %75 = arith.mulf %73, %74 : vector<1x8x8xf32>
    %76 = arith.truncf %75 : vector<1x8x8xf32> to vector<1x8x8xbf16>
    "tpu.trace_start"() <{level = 10 : i32, message = "bnm,bmd->bnd"}> : () -> ()
    %cst_24 = arith.constant dense<0.000000e+00> : vector<1x8x16xf32>
    %77 = tpu.matmul %76, %61, %cst_24 {dimension_numbers = #tpu.dot_dimension_numbers<[2], [1], [1], [2], [0, 0, 0, 1, 1, 2], [0], [0]>} : vector<1x8x8xbf16>, vector<1x8x16xbf16>, vector<1x8x16xf32> -> vector<1x8x16xf32>
    "tpu.trace_stop"() : () -> ()
    %78 = vector.shape_cast %77 : vector<1x8x16xf32> to vector<8x16xf32>
    %79 = arith.truncf %78 : vector<8x16xf32> to vector<8x16xbf16>
    %c16 = arith.constant 16 : index
    %c0_25 = arith.constant 0 : index
    %80 = vector.load %arg5[%c16, %c0_25] : memref<32x32xbf16, #tpu.memory_space<vmem>>, vector<16x32xbf16>
    %cst_26 = arith.constant dense<0.000000e+00> : vector<8x32xf32>
    %81 = tpu.matmul %79, %80, %cst_26 {dimension_numbers = #tpu.dot_dimension_numbers<[1], [0], [0], [1], [0, 0, 1, 1], [], []>} : vector<8x16xbf16>, vector<16x32xbf16>, vector<8x32xf32> -> vector<8x32xf32>
    %82 = arith.addf %55, %81 : vector<8x32xf32>
    %c0_27 = arith.constant 0 : index
    %c0_28 = arith.constant 0 : index
    %83 = vector.load %arg6[%c0_27, %c0_28] : memref<1x32xf32, #tpu.memory_space<vmem>>, vector<1x32xf32>
    %84 = vector.broadcast %83 : vector<1x32xf32> to vector<8x32xf32>
    %85 = arith.addf %82, %84 : vector<8x32xf32>
    %86 = vector.shape_cast %85 : vector<8x32xf32> to vector<1x8x32xf32>
    %c0_29 = arith.constant 0 : index
    %c0_30 = arith.constant 0 : index
    %c0_31 = arith.constant 0 : index
    %87 = vector.load %arg7[%c0_29, %c0_30, %c0_31] : memref<1x8x32xf32, #tpu.memory_space<vmem>>, vector<1x8x32xf32>
    tpu.vector_store %arg7[%c0_29, %c0_30, %c0_31], %86 {strides = array<i32>} : memref<1x8x32xf32, #tpu.memory_space<vmem>>, vector<1x8x32xf32>,
    return
  }
  func.func @transform_0(%arg0: i32) -> (i32, i32, i32) {
    %c0_i32 = arith.constant 0 : i32
    %c0_i32_0 = arith.constant 0 : i32
    %c0_i32_1 = arith.constant 0 : i32
    return %arg0, %c0_i32, %c0_i32_0 : i32, i32, i32
  }
  func.func @transform_1(%arg0: i32) -> (i32, i32) {
    %c0_i32 = arith.constant 0 : i32
    %c0_i32_0 = arith.constant 0 : i32
    %c0_i32_1 = arith.constant 0 : i32
    return %c0_i32, %c0_i32_0 : i32, i32
  }
  func.func @transform_2(%arg0: i32) -> (i32, i32) {
    %c0_i32 = arith.constant 0 : i32
    %c0_i32_0 = arith.constant 0 : i32
    %c0_i32_1 = arith.constant 0 : i32
    return %c0_i32, %c0_i32_0 : i32, i32
  }
  func.func @transform_3(%arg0: i32) -> (i32, i32) {
    %c0_i32 = arith.constant 0 : i32
    %c0_i32_0 = arith.constant 0 : i32
    %c0_i32_1 = arith.constant 0 : i32
    return %c0_i32, %c0_i32_0 : i32, i32
  }
  func.func @transform_4(%arg0: i32) -> (i32, i32) {
    %c0_i32 = arith.constant 0 : i32
    %c0_i32_0 = arith.constant 0 : i32
    %c0_i32_1 = arith.constant 0 : i32
    return %c0_i32, %c0_i32_0 : i32, i32
  }
  func.func @transform_5(%arg0: i32) -> (i32, i32) {
    %c0_i32 = arith.constant 0 : i32
    %c0_i32_0 = arith.constant 0 : i32
    %c0_i32_1 = arith.constant 0 : i32
    return %c0_i32, %c0_i32_0 : i32, i32
  }
  func.func @transform_6(%arg0: i32) -> (i32, i32, i32) {
    %c0_i32 = arith.constant 0 : i32
    %c0_i32_0 = arith.constant 0 : i32
    %c0_i32_1 = arith.constant 0 : i32
    return %arg0, %c0_i32, %c0_i32_0 : i32, i32, i32
  }
}

</mosaic_0001>

<llo_original>
// kernel: tpu_custom_call.1
$region0: #{tpu_custom_call.1}
  #allocation0 [shape = 'u32[]', space=smem, size = 0x4, offset = 0x4, fixed_abs, tag = 'smem constant byte address 0x4 - core index']
  #allocation1 [shape = 'u32[72,128]{1,0:T(1,128)}', space=vmem, size = 0x9000, scoped, tag = 'internal scratch']
  %s0 = inlined_call_operand.hbm [shape: f32[2,8,32], index: 0, kind: input, shape index: {}]
  %s1 = inlined_call_operand.hbm [shape: f32[1,32], index: 1, kind: input, shape index: {}]
  %s2 = inlined_call_operand.vmem [shape: f32[1,32], index: 2, kind: input, shape index: {}]
  %s3 = inlined_call_operand.hbm [shape: bf16[32,96], index: 3, kind: input, shape index: {}]
  %s4 = inlined_call_operand.hbm [shape: bf16[32,32], index: 4, kind: input, shape index: {}]
  %s5 = inlined_call_operand.vmem [shape: f32[1,32], index: 5, kind: input, shape index: {}]
  %s6 = inlined_call_operand.hbm [shape: f32[2,8,32], index: 6, kind: output, shape index: {}]
  %s7 = sld [smem:[#allocation0]]
  $region73: #{tpu_custom_call.1} parent=0
    _
  %s9 = ssub.s32 1, %s7
  %s10 = scalar_select 0, %s9, %s7
  $region1: #{tpu_custom_call.1} parent=0
    #allocation2 [shape = 'u8[8192]{0}', space=vmem, size = 0x2000, scoped, tag = 'input window, operand 0']
    #allocation3 [shape = 's32[2]{0}', space=sflag, size = 0x8, scoped, tag = 'scoped memory for tpu_custom_call.1']
    #allocation4 [shape = 's32[2]{0}', space=sflag, size = 0x8, scoped, tag = 'scoped memory for tpu_custom_call.1']
    #allocation5 [shape = 'u8[512]{0}', space=vmem, size = 0x400, scoped, tag = 'input window, operand 1, single buffered']
    #allocation6 [shape = 's32[1]{0}', space=sflag, size = 0x4, scoped, tag = 'scoped memory for tpu_custom_call.1']
    #allocation7 [shape = 'u8[8192]{0}', space=vmem, size = 0x2000, scoped, tag = 'input window, operand 3, single buffered']
    #allocation8 [shape = 'u8[8192]{0}', space=vmem, size = 0x2000, scoped, tag = 'input window, operand 4, single buffered']
    #allocation9 [shape = 's32[1]{0}', space=sflag, size = 0x4, scoped, tag = 'scoped memory for tpu_custom_call.1']
    #allocation10 [shape = 'u8[8192]{0}', space=vmem, size = 0x2000, scoped, tag = 'output window, operand 0']
    %11 = vsyncpa [#allocation3], 0
    %s12 = scalar_lea.sflag [#allocation3], 1
    %13 = vsyncpa %s12, 0
    %14 = vsyncpa [#allocation6], 0
    %15 = vsyncpa [#allocation9], 0
    %16 = vsyncpa [#allocation4], 0
    %s17 = scalar_lea.sflag [#allocation4], 1
    %18 = vsyncpa %s17, 0
    loop: start=0, step=1, limit=4
    $region2: #{tpu_custom_call.1} parent=1 // loop_pre_header
      _
    $region3: #{tpu_custom_call.1} parent=1 // loop_header
      %s20 = sphi 0, %s24
      %p21 = scmp.ge.s32.totalorder %s20, 4
      %s30 = sphi 0, %s32
      %s33 = sphi 0, %s30
      %s34 = sphi 0, %s33
      %s50 = sphi 0, %s34
      %s54 = sphi 0, %s54
      %s56 = sphi 0, %s54
      %s57 = sphi 0, %s56
      %s71 = sphi 0, %s57
      %s75 = sphi 0, %s75
      %s77 = sphi 0, %s75
      %s78 = sphi 0, %s77
      %s92 = sphi 0, %s78
      %s96 = sphi 0, %s96
      %s98 = sphi 0, %s96
      %s99 = sphi 0, %s98
      %s113 = sphi 0, %s99
      %s117 = sphi 0, %s117
      %s119 = sphi 0, %s117
      %s120 = sphi 0, %s119
      %s134 = sphi 0, %s120
      %s138 = sphi 0, %s138
      %s140 = sphi 0, %s138
      %s141 = sphi 0, %s140
      %s155 = sphi 0, %s141
      %s161 = sphi 0, %s163
      %s164 = sphi 0, %s161
      %s165 = sphi 0, %s164
      %s181 = sphi 0, %s165
    $region4: #{tpu_custom_call.1} parent=1 // loop_header_branch
      %23 = sbr.rel (%p21) target = $region8
    $region5: #{tpu_custom_call.1} parent=1 // loop_body
      %s25 = ssub.s32 %s20, 1
      %s26 = ssub.s32 %s20, 2
      %s27 = sadd.s32 %s20, 1
      %s28 = ssub.s32 %s20, %s27
      %p29 = scmp.eq.s32.totalorder %s28, 0
      %s31 = sadd.s32 %s30, 1
      %s32 = scalar_select %p29, %s30, %s31
      %p35 = pneg %p29
      %p36 = scmp.eq.s32.totalorder %s20, 1
      %p37 = por %p35, %p36
      %p38 = scmp.ne.s32.totalorder %s30, %s33
      %p39 = scmp.eq.s32.totalorder %s20, 0
      %p40 = por %p38, %p39
      %p41 = scmp.ne.s32.totalorder %s30, %s33
      %p42 = scmp.eq.s32.totalorder %s25, 1
      %p43 = por %p41, %p42
      %p44 = scmp.ne.s32.totalorder %s33, %s34
      %p45 = scmp.eq.s32.totalorder %s25, 0
      %p46 = por %p44, %p45
      %p47 = scmp.ne.s32.totalorder %s33, %s34
      %p48 = scmp.eq.s32.totalorder %s26, 1
      %p49 = por %p47, %p48
      %p51 = scmp.ne.s32.totalorder %s34, %s50
      %p52 = scmp.eq.s32.totalorder %s26, 0
      %p53 = por %p51, %p52
      %s55 = sadd.s32 %s54, 1
      %p58 = scmp.eq.s32.totalorder %s20, 1
      %p59 = scmp.ne.s32.totalorder %s54, %s56
      %p60 = scmp.eq.s32.totalorder %s20, 0
      %p61 = por %p59, %p60
      %p62 = scmp.ne.s32.totalorder %s54, %s56
      %p63 = scmp.eq.s32.totalorder %s25, 1
      %p64 = por %p62, %p63
      %p65 = scmp.ne.s32.totalorder %s56, %s57
      %p66 = scmp.eq.s32.totalorder %s25, 0
      %p67 = por %p65, %p66
      %p68 = scmp.ne.s32.totalorder %s56, %s57
      %p69 = scmp.eq.s32.totalorder %s26, 1
      %p70 = por %p68, %p69
      %p72 = scmp.ne.s32.totalorder %s57, %s71
      %p73 = scmp.eq.s32.totalorder %s26, 0
      %p74 = por %p72, %p73
      %s76 = sadd.s32 %s75, 1
      %p79 = scmp.eq.s32.totalorder %s20, 1
      %p80 = scmp.ne.s32.totalorder %s75, %s77
      %p81 = scmp.eq.s32.totalorder %s20, 0
      %p82 = por %p80, %p81
      %p83 = scmp.ne.s32.totalorder %s75, %s77
      %p84 = scmp.eq.s32.totalorder %s25, 1
      %p85 = por %p83, %p84
      %p86 = scmp.ne.s32.totalorder %s77, %s78
      %p87 = scmp.eq.s32.totalorder %s25, 0
      %p88 = por %p86, %p87
      %p89 = scmp.ne.s32.totalorder %s77, %s78
      %p90 = scmp.eq.s32.totalorder %s26, 1
      %p91 = por %p89, %p90
      %p93 = scmp.ne.s32.totalorder %s78, %s92
      %p94 = scmp.eq.s32.totalorder %s26, 0
      %p95 = por %p93, %p94
      %s97 = sadd.s32 %s96, 1
      %p100 = scmp.eq.s32.totalorder %s20, 1
      %p101 = scmp.ne.s32.totalorder %s96, %s98
      %p102 = scmp.eq.s32.totalorder %s20, 0
      %p103 = por %p101, %p102
      %p104 = scmp.ne.s32.totalorder %s96, %s98
      %p105 = scmp.eq.s32.totalorder %s25, 1
      %p106 = por %p104, %p105
      %p107 = scmp.ne.s32.totalorder %s98, %s99
      %p108 = scmp.eq.s32.totalorder %s25, 0
      %p109 = por %p107, %p108
      %p110 = scmp.ne.s32.totalorder %s98, %s99
      %p111 = scmp.eq.s32.totalorder %s26, 1
      %p112 = por %p110, %p111
      %p114 = scmp.ne.s32.totalorder %s99, %s113
      %p115 = scmp.eq.s32.totalorder %s26, 0
      %p116 = por %p114, %p115
      %s118 = sadd.s32 %s117, 1
      %p121 = scmp.eq.s32.totalorder %s20, 1
      %p122 = scmp.ne.s32.totalorder %s117, %s119
      %p123 = scmp.eq.s32.totalorder %s20, 0
      %p124 = por %p122, %p123
      %p125 = scmp.ne.s32.totalorder %s117, %s119
      %p126 = scmp.eq.s32.totalorder %s25, 1
      %p127 = por %p125, %p126
      %p128 = scmp.ne.s32.totalorder %s119, %s120
      %p129 = scmp.eq.s32.totalorder %s25, 0
      %p130 = por %p128, %p129
      %p131 = scmp.ne.s32.totalorder %s119, %s120
      %p132 = scmp.eq.s32.totalorder %s26, 1
      %p133 = por %p131, %p132
      %p135 = scmp.ne.s32.totalorder %s120, %s134
      %p136 = scmp.eq.s32.totalorder %s26, 0
      %p137 = por %p135, %p136
      %s139 = sadd.s32 %s138, 1
      %p142 = scmp.eq.s32.totalorder %s20, 1
      %p143 = scmp.ne.s32.totalorder %s138, %s140
      %p144 = scmp.eq.s32.totalorder %s20, 0
      %p145 = por %p143, %p144
      %p146 = scmp.ne.s32.totalorder %s138, %s140
      %p147 = scmp.eq.s32.totalorder %s25, 1
      %p148 = por %p146, %p147
      %p149 = scmp.ne.s32.totalorder %s140, %s141
      %p150 = scmp.eq.s32.totalorder %s25, 0
      %p151 = por %p149, %p150
      %p152 = scmp.ne.s32.totalorder %s140, %s141
      %p153 = scmp.eq.s32.totalorder %s26, 1
      %p154 = por %p152, %p153
      %p156 = scmp.ne.s32.totalorder %s141, %s155
      %p157 = scmp.eq.s32.totalorder %s26, 0
      %p158 = por %p156, %p157
      %s159 = ssub.s32 %s20, %s27
      %p160 = scmp.eq.s32.totalorder %s159, 0
      %s162 = sadd.s32 %s161, 1
      %s163 = scalar_select %p160, %s161, %s162
      %p166 = pneg %p160
      %p167 = scmp.eq.s32.totalorder %s20, 1
      %p168 = por %p166, %p167
      %p169 = scmp.ne.s32.totalorder %s161, %s164
      %p170 = scmp.eq.s32.totalorder %s20, 0
      %p171 = por %p169, %p170
      %p172 = scmp.ne.s32.totalorder %s161, %s164
      %p173 = scmp.eq.s32.totalorder %s25, 1
      %p174 = por %p172, %p173
      %p175 = scmp.ne.s32.totalorder %s164, %s165
      %p176 = scmp.eq.s32.totalorder %s25, 0
      %p177 = por %p175, %p176
      %p178 = scmp.ne.s32.totalorder %s164, %s165
      %p179 = scmp.eq.s32.totalorder %s26, 1
      %p180 = por %p178, %p179
      %p182 = scmp.ne.s32.totalorder %s165, %s181
      %p183 = scmp.eq.s32.totalorder %s26, 0
      %p184 = por %p182, %p183
      %p185 = scmp.le.s32.totalorder 1, %s20
      %p186 = scmp.lt.s32.totalorder %s20, 3
      %p187 = pnand %p185, %p186
      %p188 = pneg %p187
      // Predicated region
      $region9: #{tpu_custom_call.1} parent=5 // pred_check
        _
      $region10: #{tpu_custom_call.1} parent=5 // pred_check_branch
        %190 = sbr.rel (%p187) target = $region12
      $region11: #{tpu_custom_call.1} parent=5 // pred_region
        %s191 = ssub.s32 %s20, 1
        // Predicated region
        $region13: #{tpu_custom_call.1} parent=11 // pred_check
          %p192 = pneg %p67
        $region14: #{tpu_custom_call.1} parent=11 // pred_check_branch
          %194 = sbr.rel (%p192) target = $region16
        $region15: #{tpu_custom_call.1} parent=11 // pred_region
          %196 = vsyncadd [#allocation6], 0
          %s198 = sshll.u32 %s1, 4
          %s199 = int_to_ptr.hbm [resolvable:$true] %s198
          %s200 = sshll.u32 [#allocation5], 4
          %s201 = int_to_ptr.vmem [resolvable:$true] %s200
          %203 = dma.hbm_to_vmem [thread:$0]  %s199, 16, %s201, [#allocation6]
        $region16: #{tpu_custom_call.1} parent=11 // pred_fallthru
          _
        // Predicated region
        $region17: #{tpu_custom_call.1} parent=11 // pred_check
          %p204 = pneg %p88
        $region18: #{tpu_custom_call.1} parent=11 // pred_check_branch
          %206 = sbr.rel (%p204) target = $region20
        $region19: #{tpu_custom_call.1} parent=11 // pred_region
          _
        $region20: #{tpu_custom_call.1} parent=11 // pred_fallthru
          _
        // Predicated region
        $region21: #{tpu_custom_call.1} parent=11 // pred_check
          %p207 = pneg %p109
        $region22: #{tpu_custom_call.1} parent=11 // pred_check_branch
          %209 = sbr.rel (%p207) target = $region24
        $region23: #{tpu_custom_call.1} parent=11 // pred_region
          %211 = vsyncadd [#allocation6], 0
          %s212 = sshll.u32 %s3, 4
          %s213 = int_to_ptr.hbm [resolvable:$true] %s212
          %s214 = sshll.u32 [#allocation7], 4
          %s215 = int_to_ptr.vmem [resolvable:$true] %s214
          %220 = dma.hbm_to_vmem [thread:$0]  %s213, 256, %s215, [#allocation6], 64, 64, 4
        $region24: #{tpu_custom_call.1} parent=11 // pred_fallthru
          _
        // Predicated region
        $region25: #{tpu_custom_call.1} parent=11 // pred_check
          %p221 = pneg %p130
        $region26: #{tpu_custom_call.1} parent=11 // pred_check_branch
          %223 = sbr.rel (%p221) target = $region28
        $region27: #{tpu_custom_call.1} parent=11 // pred_region
          %225 = vsyncadd [#allocation9], 0
          %s226 = sshll.u32 %s4, 4
          %s227 = int_to_ptr.hbm [resolvable:$true] %s226
          %s228 = sshll.u32 [#allocation8], 4
          %s229 = int_to_ptr.vmem [resolvable:$true] %s228
          %234 = dma.hbm_to_vmem [thread:$0]  %s227, 256, %s229, [#allocation9], 64, 64, 4
        $region28: #{tpu_custom_call.1} parent=11 // pred_fallthru
          _
        // Predicated region
        $region29: #{tpu_custom_call.1} parent=11 // pred_check
          %p235 = pneg %p151
        $region30: #{tpu_custom_call.1} parent=11 // pred_check_branch
          %237 = sbr.rel (%p235) target = $region32
        $region31: #{tpu_custom_call.1} parent=11 // pred_region
          _
        $region32: #{tpu_custom_call.1} parent=11 // pred_fallthru
          _
      $region12: #{tpu_custom_call.1} parent=5 // pred_fallthru
        _
      %p238 = scmp.lt.s32.totalorder %s20, 2
      // Predicated region
      $region33: #{tpu_custom_call.1} parent=5 // pred_check
        %p239 = pneg %p238
      $region34: #{tpu_custom_call.1} parent=5 // pred_check_branch
        %241 = sbr.rel (%p239) target = $region36
      $region35: #{tpu_custom_call.1} parent=5 // pred_region
        // Predicated region
        $region37: #{tpu_custom_call.1} parent=35 // pred_check
          %p242 = pneg %p40
        $region38: #{tpu_custom_call.1} parent=35 // pred_check_branch
          %244 = sbr.rel (%p242) target = $region40
        $region39: #{tpu_custom_call.1} parent=35 // pred_region
          %s245 = sand.u32 %s30, 1
          %s246 = scalar_lea.sflag [#allocation3], %s245
          %s247 = sand.u32 %s30, 1
          %s248 = smul.addr %s247, 8
          %s249 = scalar_lea.vmem [#allocation2], %s248
          %251 = vsyncadd %s246, 0
          %s252 = smul.addr %s20, 8
          %s253 = scalar_lea.hbm %s0, %s252
          %s255 = sshll.u32 %s253, 4
          %s256 = int_to_ptr.hbm [resolvable:$true] %s255
          %s257 = sshll.u32 %s249, 4
          %s258 = int_to_ptr.vmem [resolvable:$true] %s257
          %260 = dma.hbm_to_vmem [thread:$0]  %s256, 128, %s258, %s246
        $region40: #{tpu_custom_call.1} parent=35 // pred_fallthru
          _
      $region36: #{tpu_custom_call.1} parent=5 // pred_fallthru
        _
      %p261 = scmp.le.s32.totalorder 1, %s20
      %p262 = scmp.lt.s32.totalorder %s20, 3
      %p263 = pnand %p261, %p262
      %p264 = pneg %p263
      // Predicated region
      $region41: #{tpu_custom_call.1} parent=5 // pred_check
        _
      $region42: #{tpu_custom_call.1} parent=5 // pred_check_branch
        %266 = sbr.rel (%p263) target = $region44
      $region43: #{tpu_custom_call.1} parent=5 // pred_region
        %s267 = ssub.s32 %s20, 1
        %s268 = sand.u32 %s33, 1
        %s269 = scalar_lea.sflag [#allocation3], %s268
        %s270 = sand.u32 %s33, 1
        %s271 = smul.addr %s270, 8
        %s272 = scalar_lea.vmem [#allocation2], %s271
        // Predicated region
        $region45: #{tpu_custom_call.1} parent=43 // pred_check
          %p273 = pneg %p46
        $region46: #{tpu_custom_call.1} parent=43 // pred_check_branch
          %275 = sbr.rel (%p273) target = $region48
        $region47: #{tpu_custom_call.1} parent=43 // pred_region
          %277 = dma.done %s269, 128
        $region48: #{tpu_custom_call.1} parent=43 // pred_fallthru
          _
        // Predicated region
        $region49: #{tpu_custom_call.1} parent=43 // pred_check
          %p278 = pneg %p67
        $region50: #{tpu_custom_call.1} parent=43 // pred_check_branch
          %280 = sbr.rel (%p278) target = $region52
        $region51: #{tpu_custom_call.1} parent=43 // pred_region
          %282 = dma.done [#allocation6], 16
        $region52: #{tpu_custom_call.1} parent=43 // pred_fallthru
          _
        // Predicated region
        $region53: #{tpu_custom_call.1} parent=43 // pred_check
          %p283 = pneg %p109
        $region54: #{tpu_custom_call.1} parent=43 // pred_check_branch
          %285 = sbr.rel (%p283) target = $region56
        $region55: #{tpu_custom_call.1} parent=43 // pred_region
          %287 = dma.done [#allocation6], 256
        $region56: #{tpu_custom_call.1} parent=43 // pred_fallthru
          _
        // Predicated region
        $region57: #{tpu_custom_call.1} parent=43 // pred_check
          %p288 = pneg %p130
        $region58: #{tpu_custom_call.1} parent=43 // pred_check_branch
          %290 = sbr.rel (%p288) target = $region60
        $region59: #{tpu_custom_call.1} parent=43 // pred_region
          %292 = dma.done [#allocation9], 256
        $region60: #{tpu_custom_call.1} parent=43 // pred_fallthru
          _
        %s293 = sand.u32 %s33, 1
        %s294 = scalar_lea.sflag [#allocation3], %s293
        %s295 = sand.u32 %s33, 1
        %s296 = smul.addr %s295, 8
        %s297 = scalar_lea.vmem [#allocation2], %s296
        %p298 = pneg %p46
        %p299 = pneg %p43
        %p300 = pneg %p67
        %p301 = pneg %p64
        %p302 = pneg %p88
        %p303 = pneg %p85
        %p304 = pneg %p109
        %p305 = pneg %p106
        %p306 = pneg %p130
        %p307 = pneg %p127
        %p308 = pneg %p151
        %p309 = pneg %p148
        %p310 = pneg %p177
        %p311 = pneg %p174
        %s312 = sand.u32 %s164, 1
        %s313 = scalar_lea.sflag [#allocation4], %s312
        %s314 = sand.u32 %s164, 1
        %s315 = smul.addr %s314, 8
        %s316 = scalar_lea.vmem [#allocation10], %s315
        %v318 = vld [vmem:[%s272] sm:$0xff]
        %vm319 = vcmask 261120
        %v320 = vsel %vm319, %v318, 0.0
        %321 = vadd.xlane.f32.xlu0 %v320
        %v322 = vpop.xlane.xlu0 %321
        %v323 = vmul.f32 %v322, 0.03125
        %v324 = vsub.f32 %v318, %v323
        %v325 = vmul.f32 %v324, %v324
        %v326 = vsel %vm319, %v325, 0.0
        %327 = vadd.xlane.f32.xlu0 %v326
        %v328 = vpop.xlane.xlu0 %327
        %v329 = vmul.f32 %v328, 0.03125
        %v330 = vadd.f32 %v329, 1e-05
        %v331 = vrsqrt.pop %v330
        %v332 = vmul.f32 %v331, %v330
        %v333 = vmul.f32 %v332, %v331
        %v334 = vmul.f32 0.5, %v333
        %v335 = vsub.f32 1.5, %v334
        %v336 = vmul.f32 %v331, %v335
        %vm337 = vweird.f32 %v330
        %vm338 = vweird.f32 %v331
        %vm339 = vmor %vm337, %vm338
        %v340 = vsel %vm339, %v331, %v336
        %v341 = vmul.f32 %v324, %v340
        %v342 = vld [vmem:[#allocation5] sm:$0x1]
        %v344 = vperm.slane %v342, 0
        %v346 = vmul.f32 %v341, %v344
        %v347 = vld [vmem:[%s2] sm:$0x1]
        %v349 = vperm.slane %v347, 0
        %v351 = vadd.f32 %v346, %v349
        %v352 = vpack.c.bf16 %v351, %v351
        %v353 = vld [vmem:[#allocation7] sm:$0xf]
        %v354 = vld [vmem:[#allocation7 + $0x4] sm:$0xf]
        %v355 = vld [vmem:[#allocation7 + $0x8] sm:$0xf]
        %v356 = vld [vmem:[#allocation7 + $0xc] sm:$0xf]
        %v361 = vunpack.c.l.b16 %v353
        %v362 = vunpack.c.l.b16 %v354
        %v363 = vunpack.c.l.b16 %v355
        %v364 = vunpack.c.l.b16 %v356
        %v365 = vpack.c.b16 %v362, %v361
        %v366 = vpack.c.b16 %v364, %v363
        %v370 = vsel %vm319, %v352, 0
        %372 = vmatpush.bf16.msra.mxu0 0
        %373 = vmatpush.bf16.msra.mxu0 0
        %374 = vmatpush.bf16.msra.mxu0 0
        %375 = vmatpush.bf16.msra.mxu0 0
        %376 = vmatpush.bf16.msra.mxu0 0
        %377 = vmatpush.bf16.msra.mxu0 0
        %378 = vmatpush.bf16.msra.mxu0 %v366
        %379 = vmatpush.bf16.msra.mxu0 %v365
        %380 = vmatmul.bf16.gmra.mxu0 %v370
        %v381 = vpop.f32.mrf.mxu0
        %v382 = vadd.f32 0.0, %v381
        %v383 = vpop.f32.mrf.mxu0
        %384 = vdwg.mxu0
        %v385 = vpack.c.bf16 %v382, %v382
        %v387 = vunpack.c.l.b16 %v385
        %v388 = vpack.c.b16 %v387, %v387
        %389 = vrot.lane.b32.xlu0 %v388, 96
        %v390 = vpop.permute.xlu0 %389
        %vm391 = vcmask 130048
        %v393 = vsel %vm391, %v385, 0
        %v396 = vsel %vm391, %v390, 0
        %398 = vmatpush.bf16.xpose.msra.mxu0 0
        %399 = vmatpush.bf16.xpose.msra.mxu0 0
        %400 = vmatpush.bf16.xpose.msra.mxu0 0
        %401 = vmatpush.bf16.xpose.msra.mxu0 0
        %402 = vmatpush.bf16.xpose.msra.mxu0 0
        %403 = vmatpush.bf16.xpose.msra.mxu0 0
        %404 = vmatpush.bf16.xpose.msra.mxu0 0
        %405 = vmatpush.bf16.xpose.msra.mxu0 %v396
        %406 = vmatmul.bf16.gmra.mxu0 %v393
        %v407 = vpop.f32.mrf.mxu0
        %v408 = vadd.f32 0.0, %v407
        %v409 = vpop.f32.mrf.mxu0
        %410 = vdwg.mxu0
        %vm411 = vcmask 64512
        %v412 = vsel %vm411, %v408, -inf
        %413 = vmax.xlane.f32.xlu0 %v412
        %v414 = vpop.xlane.xlu0 %413
        %v415 = vsub.f32 %v408, %v414
        %v416 = vpack.c.bf16 %v415, %v415
        %v417 = vunpack.c.l.bf16 %v416
        %v418 = vmul.f32 %v417, 1.442695
        %v419 = vpow.pop %v418
        %v420 = vpack.c.bf16 %v419, %v419
        %v421 = vunpack.c.l.bf16 %v420
        %v422 = vsel %vm411, %v421, 0.0
        %423 = vadd.xlane.f32.xlu0 %v422
        %v424 = vpop.xlane.xlu0 %423
        %v425 = vrcp.pop %v424
        %v426 = vmul.f32 %v421, %v425
        %v427 = vpack.c.bf16 %v426, %v426
        %428 = vrot.lane.b32.xlu0 %v388, 64
        %v429 = vpop.permute.xlu0 %428
        %v431 = vsel %vm411, %v427, 0
        %vm433 = vcmask 1043456
        %v435 = vsel %vm433, %v429, 0
        %437 = vmatpush.bf16.msra.mxu0 0
        %438 = vmatpush.bf16.msra.mxu0 0
        %439 = vmatpush.bf16.msra.mxu0 0
        %440 = vmatpush.bf16.msra.mxu0 0
        %441 = vmatpush.bf16.msra.mxu0 0
        %442 = vmatpush.bf16.msra.mxu0 0
        %443 = vmatpush.bf16.msra.mxu0 0
        %444 = vmatpush.bf16.msra.mxu0 %v435
        %445 = vmatmul.bf16.gmra.mxu0 %v431
        %v446 = vpop.f32.mrf.mxu0
        %v447 = vadd.f32 0.0, %v446
        %v448 = vpop.f32.mrf.mxu0
        %449 = vdwg.mxu0
        %v450 = vpack.c.bf16 %v447, %v447
        %v451 = vld [vmem:[#allocation8] sm:$0xf]
        %v452 = vld [vmem:[#allocation8 + $0x4] sm:$0xf]
        %453 = vrot.lane.b32.xlu0 %v388, 112
        %v454 = vpop.permute.xlu0 %453
        %455 = vrot.lane.b32.xlu0 %v388, 80
        %v456 = vpop.permute.xlu0 %455
        %v458 = vsel %vm391, %v454, 0
        %v461 = vsel %vm391, %v456, 0
        %463 = vmatpush.bf16.xpose.msra.mxu0 0
        %464 = vmatpush.bf16.xpose.msra.mxu0 0
        %465 = vmatpush.bf16.xpose.msra.mxu0 0
        %466 = vmatpush.bf16.xpose.msra.mxu0 0
        %467 = vmatpush.bf16.xpose.msra.mxu0 0
        %468 = vmatpush.bf16.xpose.msra.mxu0 0
        %469 = vmatpush.bf16.xpose.msra.mxu0 0
        %470 = vmatpush.bf16.xpose.msra.mxu0 %v461
        %471 = vmatmul.bf16.gmra.mxu0 %v458
        %v472 = vpop.f32.mrf.mxu0
        %v473 = vadd.f32 0.0, %v472
        %v474 = vpop.f32.mrf.mxu0
        %475 = vdwg.mxu0
        %v476 = vsel %vm411, %v473, -inf
        %477 = vmax.xlane.f32.xlu0 %v476
        %v478 = vpop.xlane.xlu0 %477
        %v479 = vsub.f32 %v473, %v478
        %v480 = vpack.c.bf16 %v479, %v479
        %v481 = vunpack.c.l.bf16 %v480
        %v482 = vmul.f32 %v481, 1.442695
        %v483 = vpow.pop %v482
        %v484 = vpack.c.bf16 %v483, %v483
        %v485 = vunpack.c.l.bf16 %v484
        %v486 = vsel %vm411, %v485, 0.0
        %487 = vadd.xlane.f32.xlu0 %v486
        %v488 = vpop.xlane.xlu0 %487
        %v489 = vrcp.pop %v488
        %v490 = vmul.f32 %v485, %v489
        %v491 = vpack.c.bf16 %v490, %v490
        %492 = vrot.lane.b32.xlu0 %v388, 48
        %v493 = vpop.permute.xlu0 %492
        %v495 = vsel %vm411, %v491, 0
        %v498 = vsel %vm433, %v493, 0
        %500 = vmatpush.bf16.msra.mxu0 0
        %501 = vmatpush.bf16.msra.mxu0 0
        %502 = vmatpush.bf16.msra.mxu0 0
        %503 = vmatpush.bf16.msra.mxu0 0
        %504 = vmatpush.bf16.msra.mxu0 0
        %505 = vmatpush.bf16.msra.mxu0 0
        %506 = vmatpush.bf16.msra.mxu0 0
        %507 = vmatpush.bf16.msra.mxu0 %v498
        %508 = vmatmul.bf16.gmra.mxu0 %v495
        %v509 = vpop.f32.mrf.mxu0
        %v510 = vadd.f32 0.0, %v509
        %v511 = vpop.f32.mrf.mxu0
        %512 = vdwg.mxu0
        %v513 = vpack.c.bf16 %v510, %v510
        %v514 = vld [vmem:[#allocation8 + $0x8] sm:$0xf]
        %v515 = vld [vmem:[#allocation8 + $0xc] sm:$0xf]
        %v518 = vunpack.c.l.b16 %v514
        %v519 = vunpack.c.l.b16 %v515
        %v520 = vpack.c.b16 %v519, %v518
        %v523 = vsel %vm391, %v513, 0
        %525 = vmatpush.bf16.msra.mxu0 0
        %526 = vmatpush.bf16.msra.mxu0 0
        %527 = vmatpush.bf16.msra.mxu0 0
        %528 = vmatpush.bf16.msra.mxu0 0
        %529 = vmatpush.bf16.msra.mxu0 0
        %530 = vmatpush.bf16.msra.mxu0 0
        %531 = vmatpush.bf16.msra.mxu0 0
        %532 = vmatpush.bf16.msra.mxu0 %v520
        %533 = vmatmul.bf16.gmra.mxu0 %v523
        %v534 = vpop.f32.mrf.mxu0
        %v535 = vadd.f32 0.0, %v534
        %v536 = vpop.f32.mrf.mxu0
        %537 = vdwg.mxu0
        %v540 = vunpack.c.l.b16 %v451
        %v541 = vunpack.c.l.b16 %v452
        %v542 = vpack.c.b16 %v541, %v540
        %v545 = vsel %vm391, %v450, 0
        %547 = vmatpush.bf16.msra.mxu0 0
        %548 = vmatpush.bf16.msra.mxu0 0
        %549 = vmatpush.bf16.msra.mxu0 0
        %550 = vmatpush.bf16.msra.mxu0 0
        %551 = vmatpush.bf16.msra.mxu0 0
        %552 = vmatpush.bf16.msra.mxu0 0
        %553 = vmatpush.bf16.msra.mxu0 0
        %554 = vmatpush.bf16.msra.mxu0 %v542
        %555 = vmatmul.bf16.gmra.mxu0 %v545
        %v556 = vpop.f32.mrf.mxu0
        %v557 = vadd.f32 %v535, %v556
        %v558 = vpop.f32.mrf.mxu0
        %559 = vdwg.mxu0
        %v560 = vld [vmem:[%s5] sm:$0x1]
        %v562 = vperm.slane %v560, 0
        %v564 = vadd.f32 %v557, %v562
        %565 = vst.msk [vmem:[%s316] sm:$0xff] %vm319, %v564
        %s566 = sand.u32 %s164, 1
        %s567 = scalar_lea.sflag [#allocation4], %s566
        %s568 = sand.u32 %s164, 1
        %s569 = smul.addr %s568, 8
        %s570 = scalar_lea.vmem [#allocation10], %s569
        // Predicated region
        $region61: #{tpu_custom_call.1} parent=43 // pred_check
          %p571 = pneg %p174
        $region62: #{tpu_custom_call.1} parent=43 // pred_check_branch
          %573 = sbr.rel (%p571) target = $region64
        $region63: #{tpu_custom_call.1} parent=43 // pred_region
          %575 = vsyncadd %s567, 0
          %s576 = smul.addr %s25, 8
          %s577 = scalar_lea.hbm %s6, %s576
          %s579 = sshll.u32 %s570, 4
          %s580 = int_to_ptr.vmem [resolvable:$true] %s579
          %s581 = sshll.u32 %s577, 4
          %s582 = int_to_ptr.hbm [resolvable:$true] %s581
          %584 = dma.vmem_to_hbm [thread:$0]  %s580, 128, %s582, %s567
        $region64: #{tpu_custom_call.1} parent=43 // pred_fallthru
          _
      $region44: #{tpu_custom_call.1} parent=5 // pred_fallthru
        _
      %p585 = scmp.le.s32.totalorder 2, %s20
      // Predicated region
      $region65: #{tpu_custom_call.1} parent=5 // pred_check
        %p586 = pneg %p585
      $region66: #{tpu_custom_call.1} parent=5 // pred_check_branch
        %588 = sbr.rel (%p586) target = $region68
      $region67: #{tpu_custom_call.1} parent=5 // pred_region
        %s589 = ssub.s32 %s20, 2
        // Predicated region
        $region69: #{tpu_custom_call.1} parent=67 // pred_check
          %p590 = pneg %p180
        $region70: #{tpu_custom_call.1} parent=67 // pred_check_branch
          %592 = sbr.rel (%p590) target = $region72
        $region71: #{tpu_custom_call.1} parent=67 // pred_region
          %s593 = sand.u32 %s165, 1
          %s594 = scalar_lea.sflag [#allocation4], %s593
          %s595 = sand.u32 %s165, 1
          %s596 = smul.addr %s595, 8
          %s597 = scalar_lea.vmem [#allocation10], %s596
          %599 = dma.done %s594, 128
        $region72: #{tpu_custom_call.1} parent=67 // pred_fallthru
          _
      $region68: #{tpu_custom_call.1} parent=5 // pred_fallthru
        _
    $region6: #{tpu_custom_call.1} parent=1 // loop_footer
      %s24 = sadd.s32 1, %s20
    $region7: #{tpu_custom_call.1} parent=1 // loop_footer_branch
      %19 = sbr.rel target = $region3
    $region8: #{tpu_custom_call.1} parent=1 // loop_exit
      _
    %600 = vsyncpa [#allocation3], 1
    %s601 = scalar_lea.sflag [#allocation3], 1
    %602 = vsyncpa %s601, 1
    %603 = vsyncpa [#allocation6], 1
    %604 = vsyncpa [#allocation9], 1
    %605 = vsyncpa [#allocation4], 1
    %s606 = scalar_lea.sflag [#allocation4], 1
    %607 = vsyncpa %s606, 1

// kernel: tpu_custom_call.1
$region0: #{tpu_custom_call.1}
  #allocation0 [shape = 'u32[]', space=smem, size = 0x4, offset = 0x4, fixed_abs, tag = 'smem constant byte address 0x4 - core index']
  #allocation1 [shape = 'u32[72,128]{1,0:T(1,128)}', space=vmem, size = 0x9000, scoped, tag = 'internal scratch']
  %s0 = inlined_call_operand.hbm [shape: f32[2,8,32], index: 0, kind: input, shape index: {}]
  %s1 = inlined_call_operand.hbm [shape: f32[1,32], index: 1, kind: input, shape index: {}]
  %s2 = inlined_call_operand.vmem [shape: f32[1,32], index: 2, kind: input, shape index: {}]
  %s3 = inlined_call_operand.hbm [shape: bf16[32,96], index: 3, kind: input, shape index: {}]
  %s4 = inlined_call_operand.hbm [shape: bf16[32,32], index: 4, kind: input, shape index: {}]
  %s5 = inlined_call_operand.vmem [shape: f32[1,32], index: 5, kind: input, shape index: {}]
  %s6 = inlined_call_operand.hbm [shape: f32[2,8,32], index: 6, kind: output, shape index: {}]
  %s7 = sld [smem:[#allocation0]]
  $region73: #{tpu_custom_call.1} parent=0
    _
  %s9 = ssub.s32 1, %s7
  %s10 = scalar_select 0, %s9, %s7
  $region1: #{tpu_custom_call.1} parent=0
    #allocation2 [shape = 'u8[8192]{0}', space=vmem, size = 0x2000, scoped, tag = 'input window, operand 0']
    #allocation3 [shape = 's32[2]{0}', space=sflag, size = 0x8, scoped, tag = 'scoped memory for tpu_custom_call.1']
    #allocation4 [shape = 's32[2]{0}', space=sflag, size = 0x8, scoped, tag = 'scoped memory for tpu_custom_call.1']
    #allocation5 [shape = 'u8[512]{0}', space=vmem, size = 0x400, scoped, tag = 'input window, operand 1, single buffered']
    #allocation6 [shape = 's32[1]{0}', space=sflag, size = 0x4, scoped, tag = 'scoped memory for tpu_custom_call.1']
    #allocation7 [shape = 'u8[8192]{0}', space=vmem, size = 0x2000, scoped, tag = 'input window, operand 3, single buffered']
    #allocation8 [shape = 'u8[8192]{0}', space=vmem, size = 0x2000, scoped, tag = 'input window, operand 4, single buffered']
    #allocation9 [shape = 's32[1]{0}', space=sflag, size = 0x4, scoped, tag = 'scoped memory for tpu_custom_call.1']
    #allocation10 [shape = 'u8[8192]{0}', space=vmem, size = 0x2000, scoped, tag = 'output window, operand 0']
    %11 = vsyncpa [#allocation3], 0
    %s12 = scalar_lea.sflag [#allocation3], 1
    %13 = vsyncpa %s12, 0
    %14 = vsyncpa [#allocation6], 0
    %15 = vsyncpa [#allocation9], 0
    %16 = vsyncpa [#allocation4], 0
    %s17 = scalar_lea.sflag [#allocation4], 1
    %18 = vsyncpa %s17, 0
    loop: start=0, step=1, limit=4
    $region2: #{tpu_custom_call.1} parent=1 // loop_pre_header
      _
    $region3: #{tpu_custom_call.1} parent=1 // loop_header
      %s20 = sphi 0, %s24
      %p21 = scmp.ge.s32.totalorder %s20, 4
      %s30 = sphi 0, %s32
      %s33 = sphi 0, %s30
      %s34 = sphi 0, %s33
      %s50 = sphi 0, %s34
      %s54 = sphi 0, %s54
      %s56 = sphi 0, %s54
      %s57 = sphi 0, %s56
      %s71 = sphi 0, %s57
      %s75 = sphi 0, %s75
      %s77 = sphi 0, %s75
      %s78 = sphi 0, %s77
      %s92 = sphi 0, %s78
      %s96 = sphi 0, %s96
      %s98 = sphi 0, %s96
      %s99 = sphi 0, %s98
      %s113 = sphi 0, %s99
      %s117 = sphi 0, %s117
      %s119 = sphi 0, %s117
      %s120 = sphi 0, %s119
      %s134 = sphi 0, %s120
      %s138 = sphi 0, %s138
      %s140 = sphi 0, %s138
      %s141 = sphi 0, %s140
      %s155 = sphi 0, %s141
      %s161 = sphi 0, %s163
      %s164 = sphi 0, %s161
      %s165 = sphi 0, %s164
      %s181 = sphi 0, %s165
    $region4: #{tpu_custom_call.1} parent=1 // loop_header_branch
      %23 = sbr.rel (%p21) target = $region8
    $region5: #{tpu_custom_call.1} parent=1 // loop_body
      %s25 = ssub.s32 %s20, 1
      %s26 = ssub.s32 %s20, 2
      %s27 = sadd.s32 %s20, 1
      %s28 = ssub.s32 %s20, %s27
      %p29 = scmp.eq.s32.totalorder %s28, 0
      %s31 = sadd.s32 %s30, 1
      %s32 = scalar_select %p29, %s30, %s31
      %p35 = pneg %p29
      %p36 = scmp.eq.s32.totalorder %s20, 1
      %p37 = por %p35, %p36
      %p38 = scmp.ne.s32.totalorder %s30, %s33
      %p39 = scmp.eq.s32.totalorder %s20, 0
      %p40 = por %p38, %p39
      %p41 = scmp.ne.s32.totalorder %s30, %s33
      %p42 = scmp.eq.s32.totalorder %s25, 1
      %p43 = por %p41, %p42
      %p44 = scmp.ne.s32.totalorder %s33, %s34
      %p45 = scmp.eq.s32.totalorder %s25, 0
      %p46 = por %p44, %p45
      %p47 = scmp.ne.s32.totalorder %s33, %s34
      %p48 = scmp.eq.s32.totalorder %s26, 1
      %p49 = por %p47, %p48
      %p51 = scmp.ne.s32.totalorder %s34, %s50
      %p52 = scmp.eq.s32.totalorder %s26, 0
      %p53 = por %p51, %p52
      %s55 = sadd.s32 %s54, 1
      %p58 = scmp.eq.s32.totalorder %s20, 1
      %p59 = scmp.ne.s32.totalorder %s54, %s56
      %p60 = scmp.eq.s32.totalorder %s20, 0
      %p61 = por %p59, %p60
      %p62 = scmp.ne.s32.totalorder %s54, %s56
      %p63 = scmp.eq.s32.totalorder %s25, 1
      %p64 = por %p62, %p63
      %p65 = scmp.ne.s32.totalorder %s56, %s57
      %p66 = scmp.eq.s32.totalorder %s25, 0
      %p67 = por %p65, %p66
      %p68 = scmp.ne.s32.totalorder %s56, %s57
      %p69 = scmp.eq.s32.totalorder %s26, 1
      %p70 = por %p68, %p69
      %p72 = scmp.ne.s32.totalorder %s57, %s71
      %p73 = scmp.eq.s32.totalorder %s26, 0
      %p74 = por %p72, %p73
      %s76 = sadd.s32 %s75, 1
      %p79 = scmp.eq.s32.totalorder %s20, 1
      %p80 = scmp.ne.s32.totalorder %s75, %s77
      %p81 = scmp.eq.s32.totalorder %s20, 0
      %p82 = por %p80, %p81
      %p83 = scmp.ne.s32.totalorder %s75, %s77
      %p84 = scmp.eq.s32.totalorder %s25, 1
      %p85 = por %p83, %p84
      %p86 = scmp.ne.s32.totalorder %s77, %s78
      %p87 = scmp.eq.s32.totalorder %s25, 0
      %p88 = por %p86, %p87
      %p89 = scmp.ne.s32.totalorder %s77, %s78
      %p90 = scmp.eq.s32.totalorder %s26, 1
      %p91 = por %p89, %p90
      %p93 = scmp.ne.s32.totalorder %s78, %s92
      %p94 = scmp.eq.s32.totalorder %s26, 0
      %p95 = por %p93, %p94
      %s97 = sadd.s32 %s96, 1
      %p100 = scmp.eq.s32.totalorder %s20, 1
      %p101 = scmp.ne.s32.totalorder %s96, %s98
      %p102 = scmp.eq.s32.totalorder %s20, 0
      %p103 = por %p101, %p102
      %p104 = scmp.ne.s32.totalorder %s96, %s98
      %p105 = scmp.eq.s32.totalorder %s25, 1
      %p106 = por %p104, %p105
      %p107 = scmp.ne.s32.totalorder %s98, %s99
      %p108 = scmp.eq.s32.totalorder %s25, 0
      %p109 = por %p107, %p108
      %p110 = scmp.ne.s32.totalorder %s98, %s99
      %p111 = scmp.eq.s32.totalorder %s26, 1
      %p112 = por %p110, %p111
      %p114 = scmp.ne.s32.totalorder %s99, %s113
      %p115 = scmp.eq.s32.totalorder %s26, 0
      %p116 = por %p114, %p115
      %s118 = sadd.s32 %s117, 1
      %p121 = scmp.eq.s32.totalorder %s20, 1
      %p122 = scmp.ne.s32.totalorder %s117, %s119
      %p123 = scmp.eq.s32.totalorder %s20, 0
      %p124 = por %p122, %p123
      %p125 = scmp.ne.s32.totalorder %s117, %s119
      %p126 = scmp.eq.s32.totalorder %s25, 1
      %p127 = por %p125, %p126
      %p128 = scmp.ne.s32.totalorder %s119, %s120
      %p129 = scmp.eq.s32.totalorder %s25, 0
      %p130 = por %p128, %p129
      %p131 = scmp.ne.s32.totalorder %s119, %s120
      %p132 = scmp.eq.s32.totalorder %s26, 1
      %p133 = por %p131, %p132
      %p135 = scmp.ne.s32.totalorder %s120, %s134
      %p136 = scmp.eq.s32.totalorder %s26, 0
      %p137 = por %p135, %p136
      %s139 = sadd.s32 %s138, 1
      %p142 = scmp.eq.s32.totalorder %s20, 1
      %p143 = scmp.ne.s32.totalorder %s138, %s140
      %p144 = scmp.eq.s32.totalorder %s20, 0
      %p145 = por %p143, %p144
      %p146 = scmp.ne.s32.totalorder %s138, %s140
      %p147 = scmp.eq.s32.totalorder %s25, 1
      %p148 = por %p146, %p147
      %p149 = scmp.ne.s32.totalorder %s140, %s141
      %p150 = scmp.eq.s32.totalorder %s25, 0
      %p151 = por %p149, %p150
      %p152 = scmp.ne.s32.totalorder %s140, %s141
      %p153 = scmp.eq.s32.totalorder %s26, 1
      %p154 = por %p152, %p153
      %p156 = scmp.ne.s32.totalorder %s141, %s155
      %p157 = scmp.eq.s32.totalorder %s26, 0
      %p158 = por %p156, %p157
      %s159 = ssub.s32 %s20, %s27
      %p160 = scmp.eq.s32.totalorder %s159, 0
      %s162 = sadd.s32 %s161, 1
      %s163 = scalar_select %p160, %s161, %s162
      %p166 = pneg %p160
      %p167 = scmp.eq.s32.totalorder %s20, 1
      %p168 = por %p166, %p167
      %p169 = scmp.ne.s32.totalorder %s161, %s164
      %p170 = scmp.eq.s32.totalorder %s20, 0
      %p171 = por %p169, %p170
      %p172 = scmp.ne.s32.totalorder %s161, %s164
      %p173 = scmp.eq.s32.totalorder %s25, 1
      %p174 = por %p172, %p173
      %p175 = scmp.ne.s32.totalorder %s164, %s165
      %p176 = scmp.eq.s32.totalorder %s25, 0
      %p177 = por %p175, %p176
      %p178 = scmp.ne.s32.totalorder %s164, %s165
      %p179 = scmp.eq.s32.totalorder %s26, 1
      %p180 = por %p178, %p179
      %p182 = scmp.ne.s32.totalorder %s165, %s181
      %p183 = scmp.eq.s32.totalorder %s26, 0
      %p184 = por %p182, %p183
      %p185 = scmp.le.s32.totalorder 1, %s20
      %p186 = scmp.lt.s32.totalorder %s20, 3
      %p187 = pnand %p185, %p186
      %p188 = pneg %p187
      // Predicated region
      $region9: #{tpu_custom_call.1} parent=5 // pred_check
        _
      $region10: #{tpu_custom_call.1} parent=5 // pred_check_branch
        %190 = sbr.rel (%p187) target = $region12
      $region11: #{tpu_custom_call.1} parent=5 // pred_region
        %s191 = ssub.s32 %s20, 1
        // Predicated region
        $region13: #{tpu_custom_call.1} parent=11 // pred_check
          %p192 = pneg %p67
        $region14: #{tpu_custom_call.1} parent=11 // pred_check_branch
          %194 = sbr.rel (%p192) target = $region16
        $region15: #{tpu_custom_call.1} parent=11 // pred_region
          %196 = vsyncadd [#allocation6], 0
          %s198 = sshll.u32 %s1, 4
          %s199 = int_to_ptr.hbm [resolvable:$true] %s198
          %s200 = sshll.u32 [#allocation5], 4
          %s201 = int_to_ptr.vmem [resolvable:$true] %s200
          %203 = dma.hbm_to_vmem [thread:$0]  %s199, 16, %s201, [#allocation6]
        $region16: #{tpu_custom_call.1} parent=11 // pred_fallthru
          _
        // Predicated region
        $region17: #{tpu_custom_call.1} parent=11 // pred_check
          %p204 = pneg %p88
        $region18: #{tpu_custom_call.1} parent=11 // pred_check_branch
          %206 = sbr.rel (%p204) target = $region20
        $region19: #{tpu_custom_call.1} parent=11 // pred_region
          _
        $region20: #{tpu_custom_call.1} parent=11 // pred_fallthru
          _
        // Predicated region
        $region21: #{tpu_custom_call.1} parent=11 // pred_check
          %p207 = pneg %p109
        $region22: #{tpu_custom_call.1} parent=11 // pred_check_branch
          %209 = sbr.rel (%p207) target = $region24
        $region23: #{tpu_custom_call.1} parent=11 // pred_region
          %211 = vsyncadd [#allocation6], 0
          %s212 = sshll.u32 %s3, 4
          %s213 = int_to_ptr.hbm [resolvable:$true] %s212
          %s214 = sshll.u32 [#allocation7], 4
          %s215 = int_to_ptr.vmem [resolvable:$true] %s214
          %220 = dma.hbm_to_vmem [thread:$0]  %s213, 256, %s215, [#allocation6], 64, 64, 4
        $region24: #{tpu_custom_call.1} parent=11 // pred_fallthru
          _
        // Predicated region
        $region25: #{tpu_custom_call.1} parent=11 // pred_check
          %p221 = pneg %p130
        $region26: #{tpu_custom_call.1} parent=11 // pred_check_branch
          %223 = sbr.rel (%p221) target = $region28
        $region27: #{tpu_custom_call.1} parent=11 // pred_region
          %225 = vsyncadd [#allocation9], 0
          %s226 = sshll.u32 %s4, 4
          %s227 = int_to_ptr.hbm [resolvable:$true] %s226
          %s228 = sshll.u32 [#allocation8], 4
          %s229 = int_to_ptr.vmem [resolvable:$true] %s228
          %234 = dma.hbm_to_vmem [thread:$0]  %s227, 256, %s229, [#allocation9], 64, 64, 4
        $region28: #{tpu_custom_call.1} parent=11 // pred_fallthru
          _
        // Predicated region
        $region29: #{tpu_custom_call.1} parent=11 // pred_check
          %p235 = pneg %p151
        $region30: #{tpu_custom_call.1} parent=11 // pred_check_branch
          %237 = sbr.rel (%p235) target = $region32
        $region31: #{tpu_custom_call.1} parent=11 // pred_region
          _
        $region32: #{tpu_custom_call.1} parent=11 // pred_fallthru
          _
      $region12: #{tpu_custom_call.1} parent=5 // pred_fallthru
        _
      %p238 = scmp.lt.s32.totalorder %s20, 2
      // Predicated region
      $region33: #{tpu_custom_call.1} parent=5 // pred_check
        %p239 = pneg %p238
      $region34: #{tpu_custom_call.1} parent=5 // pred_check_branch
        %241 = sbr.rel (%p239) target = $region36
      $region35: #{tpu_custom_call.1} parent=5 // pred_region
        // Predicated region
        $region37: #{tpu_custom_call.1} parent=35 // pred_check
          %p242 = pneg %p40
        $region38: #{tpu_custom_call.1} parent=35 // pred_check_branch
          %244 = sbr.rel (%p242) target = $region40
        $region39: #{tpu_custom_call.1} parent=35 // pred_region
          %s245 = sand.u32 %s30, 1
          %s246 = scalar_lea.sflag [#allocation3], %s245
          %s247 = sand.u32 %s30, 1
          %s248 = smul.addr %s247, 8
          %s249 = scalar_lea.vmem [#allocation2], %s248
          %251 = vsyncadd %s246, 0
          %s252 = smul.addr %s20, 8
          %s253 = scalar_lea.hbm %s0, %s252
          %s255 = sshll.u32 %s253, 4
          %s256 = int_to_ptr.hbm [resolvable:$true] %s255
          %s257 = sshll.u32 %s249, 4
          %s258 = int_to_ptr.vmem [resolvable:$true] %s257
          %260 = dma.hbm_to_vmem [thread:$0]  %s256, 128, %s258, %s246
        $region40: #{tpu_custom_call.1} parent=35 // pred_fallthru
          _
      $region36: #{tpu_custom_call.1} parent=5 // pred_fallthru
        _
      %p261 = scmp.le.s32.totalorder 1, %s20
      %p262 = scmp.lt.s32.totalorder %s20, 3
      %p263 = pnand %p261, %p262
      %p264 = pneg %p263
      // Predicated region
      $region41: #{tpu_custom_call.1} parent=5 // pred_check
        _
      $region42: #{tpu_custom_call.1} parent=5 // pred_check_branch
        %266 = sbr.rel (%p263) target = $region44
      $region43: #{tpu_custom_call.1} parent=5 // pred_region
        %s267 = ssub.s32 %s20, 1
        %s268 = sand.u32 %s33, 1
        %s269 = scalar_lea.sflag [#allocation3], %s268
        %s270 = sand.u32 %s33, 1
        %s271 = smul.addr %s270, 8
        %s272 = scalar_lea.vmem [#allocation2], %s271
        // Predicated region
        $region45: #{tpu_custom_call.1} parent=43 // pred_check
          %p273 = pneg %p46
        $region46: #{tpu_custom_call.1} parent=43 // pred_check_branch
          %275 = sbr.rel (%p273) target = $region48
        $region47: #{tpu_custom_call.1} parent=43 // pred_region
          %277 = dma.done %s269, 128
        $region48: #{tpu_custom_call.1} parent=43 // pred_fallthru
          _
        // Predicated region
        $region49: #{tpu_custom_call.1} parent=43 // pred_check
          %p278 = pneg %p67
        $region50: #{tpu_custom_call.1} parent=43 // pred_check_branch
          %280 = sbr.rel (%p278) target = $region52
        $region51: #{tpu_custom_call.1} parent=43 // pred_region
          %282 = dma.done [#allocation6], 16
        $region52: #{tpu_custom_call.1} parent=43 // pred_fallthru
          _
        // Predicated region
        $region53: #{tpu_custom_call.1} parent=43 // pred_check
          %p283 = pneg %p109
        $region54: #{tpu_custom_call.1} parent=43 // pred_check_branch
          %285 = sbr.rel (%p283) target = $region56
        $region55: #{tpu_custom_call.1} parent=43 // pred_region
          %287 = dma.done [#allocation6], 256
        $region56: #{tpu_custom_call.1} parent=43 // pred_fallthru
          _
        // Predicated region
        $region57: #{tpu_custom_call.1} parent=43 // pred_check
          %p288 = pneg %p130
        $region58: #{tpu_custom_call.1} parent=43 // pred_check_branch
          %290 = sbr.rel (%p288) target = $region60
        $region59: #{tpu_custom_call.1} parent=43 // pred_region
          %292 = dma.done [#allocation9], 256
        $region60: #{tpu_custom_call.1} parent=43 // pred_fallthru
          _
        %s293 = sand.u32 %s33, 1
        %s294 = scalar_lea.sflag [#allocation3], %s293
        %s295 = sand.u32 %s33, 1
        %s296 = smul.addr %s295, 8
        %s297 = scalar_lea.vmem [#allocation2], %s296
        %p298 = pneg %p46
        %p299 = pneg %p43
        %p300 = pneg %p67
        %p301 = pneg %p64
        %p302 = pneg %p88
        %p303 = pneg %p85
        %p304 = pneg %p109
        %p305 = pneg %p106
        %p306 = pneg %p130
        %p307 = pneg %p127
        %p308 = pneg %p151
        %p309 = pneg %p148
        %p310 = pneg %p177
        %p311 = pneg %p174
        %s312 = sand.u32 %s164, 1
        %s313 = scalar_lea.sflag [#allocation4], %s312
        %s314 = sand.u32 %s164, 1
        %s315 = smul.addr %s314, 8
        %s316 = scalar_lea.vmem [#allocation10], %s315
        %v318 = vld [vmem:[%s272] sm:$0xff]
        %vm319 = vcmask 261120
        %v320 = vsel %vm319, %v318, 0.0
        %321 = vadd.xlane.f32.xlu0 %v320
        %v322 = vpop.xlane.xlu0 %321
        %v323 = vmul.f32 %v322, 0.03125
        %v324 = vsub.f32 %v318, %v323
        %v325 = vmul.f32 %v324, %v324
        %v326 = vsel %vm319, %v325, 0.0
        %327 = vadd.xlane.f32.xlu0 %v326
        %v328 = vpop.xlane.xlu0 %327
        %v329 = vmul.f32 %v328, 0.03125
        %v330 = vadd.f32 %v329, 1e-05
        %v331 = vrsqrt.pop %v330
        %v332 = vmul.f32 %v331, %v330
        %v333 = vmul.f32 %v332, %v331
        %v334 = vmul.f32 0.5, %v333
        %v335 = vsub.f32 1.5, %v334
        %v336 = vmul.f32 %v331, %v335
        %vm337 = vweird.f32 %v330
        %vm338 = vweird.f32 %v331
        %vm339 = vmor %vm337, %vm338
        %v340 = vsel %vm339, %v331, %v336
        %v341 = vmul.f32 %v324, %v340
        %v342 = vld [vmem:[#allocation5] sm:$0x1]
        %v344 = vperm.slane %v342, 0
        %v346 = vmul.f32 %v341, %v344
        %v347 = vld [vmem:[%s2] sm:$0x1]
        %v349 = vperm.slane %v347, 0
        %v351 = vadd.f32 %v346, %v349
        %v352 = vpack.c.bf16 %v351, %v351
        %v353 = vld [vmem:[#allocation7] sm:$0xf]
        %v354 = vld [vmem:[#allocation7 + $0x4] sm:$0xf]
        %v355 = vld [vmem:[#allocation7 + $0x8] sm:$0xf]
        %v356 = vld [vmem:[#allocation7 + $0xc] sm:$0xf]
        %v361 = vunpack.c.l.b16 %v353
        %v362 = vunpack.c.l.b16 %v354
        %v363 = vunpack.c.l.b16 %v355
        %v364 = vunpack.c.l.b16 %v356
        %v365 = vpack.c.b16 %v362, %v361
        %v366 = vpack.c.b16 %v364, %v363
        %v370 = vsel %vm319, %v352, 0
        %372 = vmatpush.bf16.msra.mxu0 0
        %373 = vmatpush.bf16.msra.mxu0 0
        %374 = vmatpush.bf16.msra.mxu0 0
        %375 = vmatpush.bf16.msra.mxu0 0
        %376 = vmatpush.bf16.msra.mxu0 0
        %377 = vmatpush.bf16.msra.mxu0 0
        %378 = vmatpush.bf16.msra.mxu0 %v366
        %379 = vmatpush.bf16.msra.mxu0 %v365
        %380 = vmatmul.bf16.gmra.mxu0 %v370
        %v381 = vpop.f32.mrf.mxu0
        %v382 = vadd.f32 0.0, %v381
        %v383 = vpop.f32.mrf.mxu0
        %384 = vdwg.mxu0
        %v385 = vpack.c.bf16 %v382, %v382
        %v387 = vunpack.c.l.b16 %v385
        %v388 = vpack.c.b16 %v387, %v387
        %389 = vrot.lane.b32.xlu0 %v388, 96
        %v390 = vpop.permute.xlu0 %389
        %vm391 = vcmask 130048
        %v393 = vsel %vm391, %v385, 0
        %v396 = vsel %vm391, %v390, 0
        %398 = vmatpush.bf16.xpose.msra.mxu0 0
        %399 = vmatpush.bf16.xpose.msra.mxu0 0
        %400 = vmatpush.bf16.xpose.msra.mxu0 0
        %401 = vmatpush.bf16.xpose.msra.mxu0 0
        %402 = vmatpush.bf16.xpose.msra.mxu0 0
        %403 = vmatpush.bf16.xpose.msra.mxu0 0
        %404 = vmatpush.bf16.xpose.msra.mxu0 0
        %405 = vmatpush.bf16.xpose.msra.mxu0 %v396
        %406 = vmatmul.bf16.gmra.mxu0 %v393
        %v407 = vpop.f32.mrf.mxu0
        %v408 = vadd.f32 0.0, %v407
        %v409 = vpop.f32.mrf.mxu0
        %410 = vdwg.mxu0
        %vm411 = vcmask 64512
        %v412 = vsel %vm411, %v408, -inf
        %413 = vmax.xlane.f32.xlu0 %v412
        %v414 = vpop.xlane.xlu0 %413
        %v415 = vsub.f32 %v408, %v414
        %v416 = vpack.c.bf16 %v415, %v415
        %v417 = vunpack.c.l.bf16 %v416
        %v418 = vmul.f32 %v417, 1.442695
        %v419 = vpow.pop %v418
        %v420 = vpack.c.bf16 %v419, %v419
        %v421 = vunpack.c.l.bf16 %v420
        %v422 = vsel %vm411, %v421, 0.0
        %423 = vadd.xlane.f32.xlu0 %v422
        %v424 = vpop.xlane.xlu0 %423
        %v425 = vrcp.pop %v424
        %v426 = vmul.f32 %v421, %v425
        %v427 = vpack.c.bf16 %v426, %v426
        %428 = vrot.lane.b32.xlu0 %v388, 64
        %v429 = vpop.permute.xlu0 %428
        %v431 = vsel %vm411, %v427, 0
        %vm433 = vcmask 1043456
        %v435 = vsel %vm433, %v429, 0
        %437 = vmatpush.bf16.msra.mxu0 0
        %438 = vmatpush.bf16.msra.mxu0 0
        %439 = vmatpush.bf16.msra.mxu0 0
        %440 = vmatpush.bf16.msra.mxu0 0
        %441 = vmatpush.bf16.msra.mxu0 0
        %442 = vmatpush.bf16.msra.mxu0 0
        %443 = vmatpush.bf16.msra.mxu0 0
        %444 = vmatpush.bf16.msra.mxu0 %v435
        %445 = vmatmul.bf16.gmra.mxu0 %v431
        %v446 = vpop.f32.mrf.mxu0
        %v447 = vadd.f32 0.0, %v446
        %v448 = vpop.f32.mrf.mxu0
        %449 = vdwg.mxu0
        %v450 = vpack.c.bf16 %v447, %v447
        %v451 = vld [vmem:[#allocation8] sm:$0xf]
        %v452 = vld [vmem:[#allocation8 + $0x4] sm:$0xf]
        %453 = vrot.lane.b32.xlu0 %v388, 112
        %v454 = vpop.permute.xlu0 %453
        %455 = vrot.lane.b32.xlu0 %v388, 80
        %v456 = vpop.permute.xlu0 %455
        %v458 = vsel %vm391, %v454, 0
        %v461 = vsel %vm391, %v456, 0
        %463 = vmatpush.bf16.xpose.msra.mxu0 0
        %464 = vmatpush.bf16.xpose.msra.mxu0 0
        %465 = vmatpush.bf16.xpose.msra.mxu0 0
        %466 = vmatpush.bf16.xpose.msra.mxu0 0
        %467 = vmatpush.bf16.xpose.msra.mxu0 0
        %468 = vmatpush.bf16.xpose.msra.mxu0 0
        %469 = vmatpush.bf16.xpose.msra.mxu0 0
        %470 = vmatpush.bf16.xpose.msra.mxu0 %v461
        %471 = vmatmul.bf16.gmra.mxu0 %v458
        %v472 = vpop.f32.mrf.mxu0
        %v473 = vadd.f32 0.0, %v472
        %v474 = vpop.f32.mrf.mxu0
        %475 = vdwg.mxu0
        %v476 = vsel %vm411, %v473, -inf
        %477 = vmax.xlane.f32.xlu0 %v476
        %v478 = vpop.xlane.xlu0 %477
        %v479 = vsub.f32 %v473, %v478
        %v480 = vpack.c.bf16 %v479, %v479
        %v481 = vunpack.c.l.bf16 %v480
        %v482 = vmul.f32 %v481, 1.442695
        %v483 = vpow.pop %v482
        %v484 = vpack.c.bf16 %v483, %v483
        %v485 = vunpack.c.l.bf16 %v484
        %v486 = vsel %vm411, %v485, 0.0
        %487 = vadd.xlane.f32.xlu0 %v486
        %v488 = vpop.xlane.xlu0 %487
        %v489 = vrcp.pop %v488
        %v490 = vmul.f32 %v485, %v489
        %v491 = vpack.c.bf16 %v490, %v490
        %492 = vrot.lane.b32.xlu0 %v388, 48
        %v493 = vpop.permute.xlu0 %492
        %v495 = vsel %vm411, %v491, 0
        %v498 = vsel %vm433, %v493, 0
        %500 = vmatpush.bf16.msra.mxu0 0
        %501 = vmatpush.bf16.msra.mxu0 0
        %502 = vmatpush.bf16.msra.mxu0 0
        %503 = vmatpush.bf16.msra.mxu0 0
        %504 = vmatpush.bf16.msra.mxu0 0
        %505 = vmatpush.bf16.msra.mxu0 0
        %506 = vmatpush.bf16.msra.mxu0 0
        %507 = vmatpush.bf16.msra.mxu0 %v498
        %508 = vmatmul.bf16.gmra.mxu0 %v495
        %v509 = vpop.f32.mrf.mxu0
        %v510 = vadd.f32 0.0, %v509
        %v511 = vpop.f32.mrf.mxu0
        %512 = vdwg.mxu0
        %v513 = vpack.c.bf16 %v510, %v510
        %v514 = vld [vmem:[#allocation8 + $0x8] sm:$0xf]
        %v515 = vld [vmem:[#allocation8 + $0xc] sm:$0xf]
        %v518 = vunpack.c.l.b16 %v514
        %v519 = vunpack.c.l.b16 %v515
        %v520 = vpack.c.b16 %v519, %v518
        %v523 = vsel %vm391, %v513, 0
        %525 = vmatpush.bf16.msra.mxu0 0
        %526 = vmatpush.bf16.msra.mxu0 0
        %527 = vmatpush.bf16.msra.mxu0 0
        %528 = vmatpush.bf16.msra.mxu0 0
        %529 = vmatpush.bf16.msra.mxu0 0
        %530 = vmatpush.bf16.msra.mxu0 0
        %531 = vmatpush.bf16.msra.mxu0 0
        %532 = vmatpush.bf16.msra.mxu0 %v520
        %533 = vmatmul.bf16.gmra.mxu0 %v523
        %v534 = vpop.f32.mrf.mxu0
        %v535 = vadd.f32 0.0, %v534
        %v536 = vpop.f32.mrf.mxu0
        %537 = vdwg.mxu0
        %v540 = vunpack.c.l.b16 %v451
        %v541 = vunpack.c.l.b16 %v452
        %v542 = vpack.c.b16 %v541, %v540
        %v545 = vsel %vm391, %v450, 0
        %547 = vmatpush.bf16.msra.mxu0 0
        %548 = vmatpush.bf16.msra.mxu0 0
        %549 = vmatpush.bf16.msra.mxu0 0
        %550 = vmatpush.bf16.msra.mxu0 0
        %551 = vmatpush.bf16.msra.mxu0 0
        %552 = vmatpush.bf16.msra.mxu0 0
        %553 = vmatpush.bf16.msra.mxu0 0
        %554 = vmatpush.bf16.msra.mxu0 %v542
        %555 = vmatmul.bf16.gmra.mxu0 %v545
        %v556 = vpop.f32.mrf.mxu0
        %v557 = vadd.f32 %v535, %v556
        %v558 = vpop.f32.mrf.mxu0
        %559 = vdwg.mxu0
        %v560 = vld [vmem:[%s5] sm:$0x1]
        %v562 = vperm.slane %v560, 0
        %v564 = vadd.f32 %v557, %v562
        %565 = vst.msk [vmem:[%s316] sm:$0xff] %vm319, %v564
        %s566 = sand.u32 %s164, 1
        %s567 = scalar_lea.sflag [#allocation4], %s566
        %s568 = sand.u32 %s164, 1
        %s569 = smul.addr %s568, 8
        %s570 = scalar_lea.vmem [#allocation10], %s569
        // Predicated region
        $region61: #{tpu_custom_call.1} parent=43 // pred_check
          %p571 = pneg %p174
        $region62: #{tpu_custom_call.1} parent=43 // pred_check_branch
          %573 = sbr.rel (%p571) target = $region64
        $region63: #{tpu_custom_call.1} parent=43 // pred_region
          %575 = vsyncadd %s567, 0
          %s576 = smul.addr %s25, 8
          %s577 = scalar_lea.hbm %s6, %s576
          %s579 = sshll.u32 %s570, 4
          %s580 = int_to_ptr.vmem [resolvable:$true] %s579
          %s581 = sshll.u32 %s577, 4
          %s582 = int_to_ptr.hbm [resolvable:$true] %s581
          %584 = dma.vmem_to_hbm [thread:$0]  %s580, 128, %s582, %s567
        $region64: #{tpu_custom_call.1} parent=43 // pred_fallthru
          _
      $region44: #{tpu_custom_call.1} parent=5 // pred_fallthru
        _
      %p585 = scmp.le.s32.totalorder 2, %s20
      // Predicated region
      $region65: #{tpu_custom_call.1} parent=5 // pred_check
        %p586 = pneg %p585
      $region66: #{tpu_custom_call.1} parent=5 // pred_check_branch
        %588 = sbr.rel (%p586) target = $region68
      $region67: #{tpu_custom_call.1} parent=5 // pred_region
        %s589 = ssub.s32 %s20, 2
        // Predicated region
        $region69: #{tpu_custom_call.1} parent=67 // pred_check
          %p590 = pneg %p180
        $region70: #{tpu_custom_call.1} parent=67 // pred_check_branch
          %592 = sbr.rel (%p590) target = $region72
        $region71: #{tpu_custom_call.1} parent=67 // pred_region
          %s593 = sand.u32 %s165, 1
          %s594 = scalar_lea.sflag [#allocation4], %s593
          %s595 = sand.u32 %s165, 1
          %s596 = smul.addr %s595, 8
          %s597 = scalar_lea.vmem [#allocation10], %s596
          %599 = dma.done %s594, 128
        $region72: #{tpu_custom_call.1} parent=67 // pred_fallthru
          _
      $region68: #{tpu_custom_call.1} parent=5 // pred_fallthru
        _
    $region6: #{tpu_custom_call.1} parent=1 // loop_footer
      %s24 = sadd.s32 1, %s20
    $region7: #{tpu_custom_call.1} parent=1 // loop_footer_branch
      %19 = sbr.rel target = $region3
    $region8: #{tpu_custom_call.1} parent=1 // loop_exit
      _
    %600 = vsyncpa [#allocation3], 1
    %s601 = scalar_lea.sflag [#allocation3], 1
    %602 = vsyncpa %s601, 1
    %603 = vsyncpa [#allocation6], 1
    %604 = vsyncpa [#allocation9], 1
    %605 = vsyncpa [#allocation4], 1
    %s606 = scalar_lea.sflag [#allocation4], 1
    %607 = vsyncpa %s606, 1

</llo_original>
